<compile_context>
chip_gen: v5e
topology: v5e:2x2
jax: 0.10.0
libtpu: 0.0.40
codegen_flags: <defaults>
</compile_context>

<pallas_src>
import math

import numpy as np
import jax
import jax.numpy as jnp
from jax.experimental import pallas as pl
from jax.experimental.pallas import tpu as pltpu

# --- small, deterministic model config (synthetic weights) ------------------
SEQ = 8
HIDDEN = 32
NUM_HEADS = 4
HEAD_DIM = HIDDEN // NUM_HEADS
INTERMEDIATE = 64
NUM_LAYERS = 2
VOCAB = 64
MAX_POS = 16
TYPE_VOCAB = 2
LN_EPS = 1e-12

HIDDEN_P = 128   # hidden axis zero-padded to a full 128-lane vreg width
INTER_P = 128    # FFN intermediate axis zero-padded likewise


def _vmem_spec():
    # whole array resident in VMEM (everything here is well under 1 MiB total)
    return pl.BlockSpec(memory_space=pltpu.MemorySpace.VMEM)


def _gelu(x):
    # TODO(synk): HF BERT/BGE uses exact erf-GELU; tanh-approx keeps the Mosaic lowering
    # clean (difference ~1e-3 relative).
    c = math.sqrt(2.0 / math.pi)
    return 0.5 * x * (1.0 + jnp.tanh(c * (x + 0.044715 * x * x * x)))


# --- single fused Pallas kernel ----------------------------------------------
def _bge_fused_kernel(emb_ref, mask_ref, emb_g_ref, emb_b_ref,
                      wqkv_ref, bqkv_ref, wo_ref, bo_ref,
                      ln1g_ref, ln1b_ref, wi_ref, bi_ref,
                      wd_ref, bd_ref, ln2g_ref, ln2b_ref,
                      out_ref):
    f32 = jnp.float32
    S = SEQ
    HP = HIDDEN_P

    # 0/1 validity mask for the zero-padded hidden lanes (hoisted; reused by every LayerNorm).
    lane_valid = (jax.lax.broadcasted_iota(jnp.int32, (S, HP), 1) < HIDDEN).astype(f32)

    def masked_ln(x, g, b):
        # mean/var over the HIDDEN valid lanes only; padded lanes (gamma=beta=0) stay exactly 0.
        mu = jnp.sum(x, axis=-1, keepdims=True) * (1.0 / HIDDEN)
        xc = (x - mu) * lane_valid
        var = jnp.sum(xc * xc, axis=-1, keepdims=True) * (1.0 / HIDDEN)
        return xc * jax.lax.rsqrt(var + LN_EPS) * g + b

    # Embedding LayerNorm.
    h = masked_ln(emb_ref[...], emb_g_ref[...], emb_b_ref[...])

    # HF-style additive mask (raw ones mask added to scores, exactly as the module does);
    # broadcast hoisted out of the unrolled head loop.
    mask_b = jnp.broadcast_to(mask_ref[...], (S, S))
    scale = 1.0 / math.sqrt(HEAD_DIM)

    for l in range(NUM_LAYERS):                  # static unroll over layers
        # ---- self-attention: fused QKV projection (one [S,HP] x [HP,3HP] matmul) ----
        qkv = jnp.dot(h, wqkv_ref[l], preferred_element_type=f32) + bqkv_ref[l]
        q = qkv[:, 0:HP]
        k = qkv[:, HP:2 * HP]
        v = qkv[:, 2 * HP:3 * HP]

        ctx_heads = []
        for hd in range(NUM_HEADS):              # static unroll over heads
            lo = hd * HEAD_DIM
            qh = q[:, lo:lo + HEAD_DIM]
            kh = k[:, lo:lo + HEAD_DIM]
            vh = v[:, lo:lo + HEAD_DIM]
            s = jax.lax.dot_general(qh, kh, (((1,), (1,)), ((), ())),
                                    preferred_element_type=f32) * scale + mask_b   # [S,S]
            s = s - jnp.max(s, axis=-1, keepdims=True)
            p = jnp.exp(s)
            p = p * pl.reciprocal(jnp.sum(p, axis=-1, keepdims=True), approx=True)
            ctx_heads.append(jnp.dot(p, vh, preferred_element_type=f32))           # [S,HD]

        # Concatenate heads in-register (no scratch round-trip, no masked partial stores),
        # then one output projection against the unpadded-row wo: [S,32] x [32,HP].
        ctx = jnp.concatenate(ctx_heads, axis=1)                                    # [S,HIDDEN]
        attn = jnp.dot(ctx, wo_ref[l], preferred_element_type=f32) + bo_ref[l]
        h1 = masked_ln(h + attn, ln1g_ref[l], ln1b_ref[l])

        # ---- GELU FFN ----
        inter = _gelu(jnp.dot(h1, wi_ref[l], preferred_element_type=f32) + bi_ref[l])
        ffn = jnp.dot(inter, wd_ref[l], preferred_element_type=f32) + bd_ref[l]
        h = masked_ln(h1 + ffn, ln2g_ref[l], ln2b_ref[l])

    # CLS token + L2 normalize (torch.nn.functional.normalize(p=2, dim=1), eps=1e-12).
    cls = h[0:1, :]
    ssq = jnp.sum(cls * cls, axis=-1, keepdims=True)
    out_ref[...] = cls * jax.lax.rsqrt(jnp.maximum(ssq, 1e-24))


# --- parameter packing: pad to lane-dense widths, fuse QKV, stack layers -----
def _pad2(w, rows, cols):
    return jnp.pad(w, ((0, rows - w.shape[0]), (0, cols - w.shape[1])))


def pack_params(params):
    HP, IP = HIDDEN_P, INTER_P
    packed = {
        'word_emb': _pad2(params['word_emb'], VOCAB, HP),
        'pos_emb': _pad2(params['pos_emb'], MAX_POS, HP),
        'type_emb': _pad2(params['type_emb'], TYPE_VOCAB, HP),
        'emb_ln_g': _pad2(params['emb_ln_g'], 1, HP),
        'emb_ln_b': _pad2(params['emb_ln_b'], 1, HP),
    }

    def stack(fn):
        return jnp.stack([fn(lp) for lp in params['layers']])

    packed['wqkv'] = stack(lambda lp: jnp.concatenate(
        [_pad2(lp['wq'], HP, HP), _pad2(lp['wk'], HP, HP), _pad2(lp['wv'], HP, HP)], axis=1))
    packed['bqkv'] = stack(lambda lp: jnp.concatenate(
        [_pad2(lp['bq'], 1, HP), _pad2(lp['bk'], 1, HP), _pad2(lp['bv'], 1, HP)], axis=1))
    # wo keeps its real HIDDEN rows (no zero-padded rows): contraction dim is 32.
    packed['wo'] = stack(lambda lp: _pad2(lp['wo'], HIDDEN, HP))
    packed['bo'] = stack(lambda lp: _pad2(lp['bo'], 1, HP))
    packed['ln1_g'] = stack(lambda lp: _pad2(lp['ln1_g'], 1, HP))
    packed['ln1_b'] = stack(lambda lp: _pad2(lp['ln1_b'], 1, HP))
    packed['wi'] = stack(lambda lp: _pad2(lp['wi'], HP, IP))
    packed['bi'] = stack(lambda lp: _pad2(lp['bi'], 1, IP))
    packed['wd'] = stack(lambda lp: _pad2(lp['wd'], IP, HP))
    packed['bd'] = stack(lambda lp: _pad2(lp['bd'], 1, HP))
    packed['ln2_g'] = stack(lambda lp: _pad2(lp['ln2_g'], 1, HP))
    packed['ln2_b'] = stack(lambda lp: _pad2(lp['ln2_b'], 1, HP))
    return packed


# --- end-to-end forward (mirrors bge.forward) --------------------------------
def bge_forward(packed, input_ids, position_ids, attention_mask):
    input_ids = input_ids.reshape(1, -1)                      # (1, S)
    token_type_ids = (1 - attention_mask).reshape(1, -1)      # (1, S), all zeros
    pos = position_ids.reshape(-1)

    # embedding gather is glue (stays in XLA); everything else runs in ONE Pallas kernel
    emb = (packed['word_emb'][input_ids[0]]
           + packed['pos_emb'][pos]
           + packed['type_emb'][token_type_ids[0]])           # [S, HP] (padded lanes are 0)

    # The module passes the raw ones mask; HF adds it to attention scores — reproduce exactly.
    mask = attention_mask.reshape(1, -1).astype(jnp.float32)  # [1, S]

    out_padded = pl.pallas_call(
        _bge_fused_kernel,
        out_shape=jax.ShapeDtypeStruct((1, HIDDEN_P), jnp.float32),
        in_specs=[_vmem_spec()] * 16,
        out_specs=_vmem_spec(),
    )(emb, mask, packed['emb_ln_g'], packed['emb_ln_b'],
      packed['wqkv'], packed['bqkv'], packed['wo'], packed['bo'],
      packed['ln1_g'], packed['ln1_b'], packed['wi'], packed['bi'],
      packed['wd'], packed['bd'], packed['ln2_g'], packed['ln2_b'])

    return out_padded[:, :HIDDEN]                             # [1, HIDDEN]


# --- pure-JAX reference (logical, unpadded sizes) -----------------------------
def _layernorm_ref(x, g, b):
    mu = jnp.mean(x, axis=-1, keepdims=True)
    var = jnp.mean((x - mu) ** 2, axis=-1, keepdims=True)
    return (x - mu) * jax.lax.rsqrt(var + LN_EPS) * g + b


def _bert_layer_ref(h, mask, lp):
    f32 = jnp.float32
    q = jnp.dot(h, lp['wq'], preferred_element_type=f32) + lp['bq']
    k = jnp.dot(h, lp['wk'], preferred_element_type=f32) + lp['bk']
    v = jnp.dot(h, lp['wv'], preferred_element_type=f32) + lp['bv']

    scale = 1.0 / math.sqrt(HEAD_DIM)
    acc = jnp.zeros(h.shape, dtype=f32)
    for hd in range(NUM_HEADS):
        lo = hd * HEAD_DIM
        qh = q[:, lo:lo + HEAD_DIM]
        kh = k[:, lo:lo + HEAD_DIM]
        vh = v[:, lo:lo + HEAD_DIM]
        scores = jnp.dot(qh, kh.T, preferred_element_type=f32) * scale + mask
        scores = scores - jnp.max(scores, axis=-1, keepdims=True)
        p = jnp.exp(scores)
        p = p / jnp.sum(p, axis=-1, keepdims=True)
        ctx = jnp.dot(p, vh, preferred_element_type=f32)
        acc = acc + jnp.dot(ctx, lp['wo'][lo:lo + HEAD_DIM, :], preferred_element_type=f32)

    h1 = _layernorm_ref(h + acc + lp['bo'], lp['ln1_g'], lp['ln1_b'])
    inter = _gelu(jnp.dot(h1, lp['wi'], preferred_element_type=f32) + lp['bi'])
    ffn = jnp.dot(inter, lp['wd'], preferred_element_type=f32) + lp['bd']
    return _layernorm_ref(h1 + ffn, lp['ln2_g'], lp['ln2_b'])


def bge_reference(params, input_ids, position_ids, attention_mask):
    input_ids = input_ids.reshape(1, -1)
    token_type_ids = (1 - attention_mask).reshape(1, -1)
    pos = position_ids.reshape(-1)
    emb = (params['word_emb'][input_ids[0]]
           + params['pos_emb'][pos]
           + params['type_emb'][token_type_ids[0]])
    h = _layernorm_ref(emb, params['emb_ln_g'], params['emb_ln_b'])
    mask = attention_mask.reshape(1, -1).astype(jnp.float32)
    for lp in params['layers']:
        h = _bert_layer_ref(h, mask, lp)
    cls = h[0:1, :]
    nrm = jnp.sqrt(jnp.sum(cls * cls, axis=-1, keepdims=True))
    return cls / jnp.maximum(nrm, 1e-12)


# --- deterministic parameter init --------------------------------------------
def init_params():
    key = jax.random.PRNGKey(0)
    keys = iter(jax.random.split(key, 3 + 12 * NUM_LAYERS))

    def nrm(shape):
        return 0.02 * jax.random.normal(next(keys), shape, dtype=jnp.float32)

    params = {
        'word_emb': nrm((VOCAB, HIDDEN)),
        'pos_emb': nrm((MAX_POS, HIDDEN)),
        'type_emb': nrm((TYPE_VOCAB, HIDDEN)),
        'emb_ln_g': jnp.ones((1, HIDDEN), jnp.float32),
        'emb_ln_b': jnp.zeros((1, HIDDEN), jnp.float32),
        'layers': [],
    }
    for _ in range(NUM_LAYERS):
        lp = {
            'wq': nrm((HIDDEN, HIDDEN)), 'bq': nrm((1, HIDDEN)),
            'wk': nrm((HIDDEN, HIDDEN)), 'bk': nrm((1, HIDDEN)),
            'wv': nrm((HIDDEN, HIDDEN)), 'bv': nrm((1, HIDDEN)),
            'wo': nrm((HIDDEN, HIDDEN)), 'bo': nrm((1, HIDDEN)),
            'ln1_g': jnp.ones((1, HIDDEN), jnp.float32),
            'ln1_b': jnp.zeros((1, HIDDEN), jnp.float32),
            'wi': nrm((HIDDEN, INTERMEDIATE)), 'bi': nrm((1, INTERMEDIATE)),
            'wd': nrm((INTERMEDIATE, HIDDEN)), 'bd': nrm((1, HIDDEN)),
            'ln2_g': jnp.ones((1, HIDDEN), jnp.float32),
            'ln2_b': jnp.zeros((1, HIDDEN), jnp.float32),
        }
        params['layers'].append(lp)
    return params


if __name__ == "__main__":
    params = init_params()
    packed = pack_params(params)          # pad to 128 lanes, fuse QKV, stack layers (one-time)

    key = jax.random.PRNGKey(0)
    input_ids = jax.random.randint(key, (SEQ,), 0, VOCAB, dtype=jnp.int32)
    position_ids = jnp.arange(SEQ, dtype=jnp.int32)[None, :]              # get_position_ids()
    attention_mask = jnp.ones((1, 1, 1, SEQ), dtype=jnp.int32)            # get_attention_mask()

    out = jax.jit(bge_forward)(packed, input_ids, position_ids, attention_mask)
    out = jax.block_until_ready(out)

    ref = bge_reference(params, input_ids, position_ids, attention_mask)
    assert out.shape == (1, HIDDEN), out.shape
    assert np.allclose(np.asarray(out), np.asarray(ref), rtol=1e-3, atol=1e-3), (
        "Pallas output does not match reference")

    print("KERNEL_OK")
</pallas_src>

<mosaic_0001>
module attributes {stable_mosaic.version = 11 : i64} {
  func.func @_bge_fused_kernel(%arg0: memref<8x128xf32, #tpu.memory_space<vmem>>, %arg1: memref<1x8xf32, #tpu.memory_space<vmem>>, %arg2: memref<1x128xf32, #tpu.memory_space<vmem>>, %arg3: memref<1x128xf32, #tpu.memory_space<vmem>>, %arg4: memref<2x128x384xf32, #tpu.memory_space<vmem>>, %arg5: memref<2x1x384xf32, #tpu.memory_space<vmem>>, %arg6: memref<2x32x128xf32, #tpu.memory_space<vmem>>, %arg7: memref<2x1x128xf32, #tpu.memory_space<vmem>>, %arg8: memref<2x1x128xf32, #tpu.memory_space<vmem>>, %arg9: memref<2x1x128xf32, #tpu.memory_space<vmem>>, %arg10: memref<2x128x128xf32, #tpu.memory_space<vmem>>, %arg11: memref<2x1x128xf32, #tpu.memory_space<vmem>>, %arg12: memref<2x128x128xf32, #tpu.memory_space<vmem>>, %arg13: memref<2x1x128xf32, #tpu.memory_space<vmem>>, %arg14: memref<2x1x128xf32, #tpu.memory_space<vmem>>, %arg15: memref<2x1x128xf32, #tpu.memory_space<vmem>>, %arg16: memref<1x128xf32, #tpu.memory_space<vmem>>) attributes {dimension_semantics = [], scalar_prefetch = 0 : i64, scratch_operands = 0 : i64, tpu.core_type = #tpu.core_type<tc>} {
    %0 = tpu.iota {dimensions = array<i32: 1>} : vector<8x128xi32>
    %c32_i32 = arith.constant 32 : i32
    %1 = vector.broadcast %c32_i32 : i32 to vector<8x128xi32>
    %2 = arith.cmpi slt, %0, %1 : vector<8x128xi32>
    %3 = arith.extui %2 : vector<8x128xi1> to vector<8x128xi32>
    %4 = arith.sitofp %3 : vector<8x128xi32> to vector<8x128xf32>
    %c0 = arith.constant 0 : index
    %c0_0 = arith.constant 0 : index
    %5 = vector.load %arg0[%c0, %c0_0] : memref<8x128xf32, #tpu.memory_space<vmem>>, vector<8x128xf32>
    %c0_1 = arith.constant 0 : index
    %c0_2 = arith.constant 0 : index
    %6 = vector.load %arg2[%c0_1, %c0_2] : memref<1x128xf32, #tpu.memory_space<vmem>>, vector<1x128xf32>
    %c0_3 = arith.constant 0 : index
    %c0_4 = arith.constant 0 : index
    %7 = vector.load %arg3[%c0_3, %c0_4] : memref<1x128xf32, #tpu.memory_space<vmem>>, vector<1x128xf32>
    %cst = arith.constant dense<0.000000e+00> : vector<8xf32>
    %8 = vector.multi_reduction <add>, %5, %cst [1] : vector<8x128xf32> to vector<8xf32>
    %9 = vector.shape_cast %8 : vector<8xf32> to vector<8x1xf32>
    %cst_5 = arith.constant 3.125000e-02 : f32
    %10 = vector.broadcast %cst_5 : f32 to vector<8x1xf32>
    %11 = arith.mulf %9, %10 : vector<8x1xf32>
    %12 = vector.broadcast %11 : vector<8x1xf32> to vector<8x128xf32>
    %13 = arith.subf %5, %12 : vector<8x128xf32>
    %14 = arith.mulf %13, %4 : vector<8x128xf32>
    %15 = arith.mulf %14, %14 : vector<8x128xf32>
    %cst_6 = arith.constant dense<0.000000e+00> : vector<8xf32>
    %16 = vector.multi_reduction <add>, %15, %cst_6 [1] : vector<8x128xf32> to vector<8xf32>
    %17 = vector.shape_cast %16 : vector<8xf32> to vector<8x1xf32>
    %cst_7 = arith.constant 3.125000e-02 : f32
    %18 = vector.broadcast %cst_7 : f32 to vector<8x1xf32>
    %19 = arith.mulf %17, %18 : vector<8x1xf32>
    %cst_8 = arith.constant 9.99999996E-13 : f32
    %20 = vector.broadcast %cst_8 : f32 to vector<8x1xf32>
    %21 = arith.addf %19, %20 : vector<8x1xf32>
    %22 = math.rsqrt %21 : vector<8x1xf32>
    %23 = vector.broadcast %22 : vector<8x1xf32> to vector<8x128xf32>
    %24 = arith.mulf %14, %23 : vector<8x128xf32>
    %25 = vector.broadcast %6 : vector<1x128xf32> to vector<8x128xf32>
    %26 = arith.mulf %24, %25 : vector<8x128xf32>
    %27 = vector.broadcast %7 : vector<1x128xf32> to vector<8x128xf32>
    %28 = arith.addf %26, %27 : vector<8x128xf32>
    %c0_9 = arith.constant 0 : index
    %c0_10 = arith.constant 0 : index
    %29 = vector.load %arg1[%c0_9, %c0_10] : memref<1x8xf32, #tpu.memory_space<vmem>>, vector<1x8xf32>
    %30 = vector.shape_cast %29 : vector<1x8xf32> to vector<1x8xf32>
    %31 = vector.broadcast %30 : vector<1x8xf32> to vector<8x8xf32>
    %c0_11 = arith.constant 0 : index
    %c0_12 = arith.constant 0 : index
    %c0_13 = arith.constant 0 : index
    %32 = vector.load %arg4[%c0_11, %c0_12, %c0_13] : memref<2x128x384xf32, #tpu.memory_space<vmem>>, vector<1x128x384xf32>
    %33 = vector.shape_cast %32 : vector<1x128x384xf32> to vector<128x384xf32>
    %cst_14 = arith.constant dense<0.000000e+00> : vector<8x384xf32>
    %34 = tpu.matmul %28, %33, %cst_14 {dimension_numbers = #tpu.dot_dimension_numbers<[1], [0], [0], [1], [0, 0, 1, 1], [], []>} : vector<8x128xf32>, vector<128x384xf32>, vector<8x384xf32> -> vector<8x384xf32>
    %c0_15 = arith.constant 0 : index
    %c0_16 = arith.constant 0 : index
    %c0_17 = arith.constant 0 : index
    %35 = vector.load %arg5[%c0_15, %c0_16, %c0_17] : memref<2x1x384xf32, #tpu.memory_space<vmem>>, vector<1x1x384xf32>
    %36 = vector.shape_cast %35 : vector<1x1x384xf32> to vector<1x384xf32>
    %37 = vector.broadcast %36 : vector<1x384xf32> to vector<8x384xf32>
    %38 = arith.addf %34, %37 : vector<8x384xf32>
    %39 = vector.extract_strided_slice %38 {offsets = [0, 0], sizes = [8, 128], strides = [1, 1]} : vector<8x384xf32> to vector<8x128xf32>
    %40 = vector.extract_strided_slice %38 {offsets = [0, 128], sizes = [8, 128], strides = [1, 1]} : vector<8x384xf32> to vector<8x128xf32>
    %41 = vector.extract_strided_slice %38 {offsets = [0, 256], sizes = [8, 128], strides = [1, 1]} : vector<8x384xf32> to vector<8x128xf32>
    %42 = vector.extract_strided_slice %39 {offsets = [0, 0], sizes = [8, 8], strides = [1, 1]} : vector<8x128xf32> to vector<8x8xf32>
    %43 = vector.extract_strided_slice %40 {offsets = [0, 0], sizes = [8, 8], strides = [1, 1]} : vector<8x128xf32> to vector<8x8xf32>
    %44 = vector.extract_strided_slice %41 {offsets = [0, 0], sizes = [8, 8], strides = [1, 1]} : vector<8x128xf32> to vector<8x8xf32>
    %cst_18 = arith.constant dense<0.000000e+00> : vector<8x8xf32>
    %45 = tpu.matmul %42, %43, %cst_18 {dimension_numbers = #tpu.dot_dimension_numbers<[1], [1], [0], [0], [0, 0, 1, 0], [], []>} : vector<8x8xf32>, vector<8x8xf32>, vector<8x8xf32> -> vector<8x8xf32>
    %cst_19 = arith.constant 0.353553385 : f32
    %46 = vector.broadcast %cst_19 : f32 to vector<8x8xf32>
    %47 = arith.mulf %45, %46 : vector<8x8xf32>
    %48 = arith.addf %47, %31 : vector<8x8xf32>
    %cst_20 = arith.constant dense<0xFF800000> : vector<8xf32>
    %49 = vector.multi_reduction <maximumf>, %48, %cst_20 [1] : vector<8x8xf32> to vector<8xf32>
    %50 = vector.shape_cast %49 : vector<8xf32> to vector<8x1xf32>
    %51 = vector.broadcast %50 : vector<8x1xf32> to vector<8x8xf32>
    %52 = arith.subf %48, %51 : vector<8x8xf32>
    %53 = math.exp %52 : vector<8x8xf32>
    %cst_21 = arith.constant dense<0.000000e+00> : vector<8xf32>
    %54 = vector.multi_reduction <add>, %53, %cst_21 [1] : vector<8x8xf32> to vector<8xf32>
    %55 = vector.shape_cast %54 : vector<8xf32> to vector<8x1xf32>
    %56 = tpu.reciprocal %55 {approx = true} : vector<8x1xf32> -> vector<8x1xf32>
    %57 = vector.broadcast %56 : vector<8x1xf32> to vector<8x8xf32>
    %58 = arith.mulf %53, %57 : vector<8x8xf32>
    %cst_22 = arith.constant dense<0.000000e+00> : vector<8x8xf32>
    %59 = tpu.matmul %58, %44, %cst_22 {dimension_numbers = #tpu.dot_dimension_numbers<[1], [0], [0], [1], [0, 0, 1, 1], [], []>} : vector<8x8xf32>, vector<8x8xf32>, vector<8x8xf32> -> vector<8x8xf32>
    %60 = vector.extract_strided_slice %39 {offsets = [0, 8], sizes = [8, 8], strides = [1, 1]} : vector<8x128xf32> to vector<8x8xf32>
    %61 = vector.extract_strided_slice %40 {offsets = [0, 8], sizes = [8, 8], strides = [1, 1]} : vector<8x128xf32> to vector<8x8xf32>
    %62 = vector.extract_strided_slice %41 {offsets = [0, 8], sizes = [8, 8], strides = [1, 1]} : vector<8x128xf32> to vector<8x8xf32>
    %cst_23 = arith.constant dense<0.000000e+00> : vector<8x8xf32>
    %63 = tpu.matmul %60, %61, %cst_23 {dimension_numbers = #tpu.dot_dimension_numbers<[1], [1], [0], [0], [0, 0, 1, 0], [], []>} : vector<8x8xf32>, vector<8x8xf32>, vector<8x8xf32> -> vector<8x8xf32>
    %cst_24 = arith.constant 0.353553385 : f32
    %64 = vector.broadcast %cst_24 : f32 to vector<8x8xf32>
    %65 = arith.mulf %63, %64 : vector<8x8xf32>
    %66 = arith.addf %65, %31 : vector<8x8xf32>
    %cst_25 = arith.constant dense<0xFF800000> : vector<8xf32>
    %67 = vector.multi_reduction <maximumf>, %66, %cst_25 [1] : vector<8x8xf32> to vector<8xf32>
    %68 = vector.shape_cast %67 : vector<8xf32> to vector<8x1xf32>
    %69 = vector.broadcast %68 : vector<8x1xf32> to vector<8x8xf32>
    %70 = arith.subf %66, %69 : vector<8x8xf32>
    %71 = math.exp %70 : vector<8x8xf32>
    %cst_26 = arith.constant dense<0.000000e+00> : vector<8xf32>
    %72 = vector.multi_reduction <add>, %71, %cst_26 [1] : vector<8x8xf32> to vector<8xf32>
    %73 = vector.shape_cast %72 : vector<8xf32> to vector<8x1xf32>
    %74 = tpu.reciprocal %73 {approx = true} : vector<8x1xf32> -> vector<8x1xf32>
    %75 = vector.broadcast %74 : vector<8x1xf32> to vector<8x8xf32>
    %76 = arith.mulf %71, %75 : vector<8x8xf32>
    %cst_27 = arith.constant dense<0.000000e+00> : vector<8x8xf32>
    %77 = tpu.matmul %76, %62, %cst_27 {dimension_numbers = #tpu.dot_dimension_numbers<[1], [0], [0], [1], [0, 0, 1, 1], [], []>} : vector<8x8xf32>, vector<8x8xf32>, vector<8x8xf32> -> vector<8x8xf32>
    %78 = vector.extract_strided_slice %39 {offsets = [0, 16], sizes = [8, 8], strides = [1, 1]} : vector<8x128xf32> to vector<8x8xf32>
    %79 = vector.extract_strided_slice %40 {offsets = [0, 16], sizes = [8, 8], strides = [1, 1]} : vector<8x128xf32> to vector<8x8xf32>
    %80 = vector.extract_strided_slice %41 {offsets = [0, 16], sizes = [8, 8], strides = [1, 1]} : vector<8x128xf32> to vector<8x8xf32>
    %cst_28 = arith.constant dense<0.000000e+00> : vector<8x8xf32>
    %81 = tpu.matmul %78, %79, %cst_28 {dimension_numbers = #tpu.dot_dimension_numbers<[1], [1], [0], [0], [0, 0, 1, 0], [], []>} : vector<8x8xf32>, vector<8x8xf32>, vector<8x8xf32> -> vector<8x8xf32>
    %cst_29 = arith.constant 0.353553385 : f32
    %82 = vector.broadcast %cst_29 : f32 to vector<8x8xf32>
    %83 = arith.mulf %81, %82 : vector<8x8xf32>
    %84 = arith.addf %83, %31 : vector<8x8xf32>
    %cst_30 = arith.constant dense<0xFF800000> : vector<8xf32>
    %85 = vector.multi_reduction <maximumf>, %84, %cst_30 [1] : vector<8x8xf32> to vector<8xf32>
    %86 = vector.shape_cast %85 : vector<8xf32> to vector<8x1xf32>
    %87 = vector.broadcast %86 : vector<8x1xf32> to vector<8x8xf32>
    %88 = arith.subf %84, %87 : vector<8x8xf32>
    %89 = math.exp %88 : vector<8x8xf32>
    %cst_31 = arith.constant dense<0.000000e+00> : vector<8xf32>
    %90 = vector.multi_reduction <add>, %89, %cst_31 [1] : vector<8x8xf32> to vector<8xf32>
    %91 = vector.shape_cast %90 : vector<8xf32> to vector<8x1xf32>
    %92 = tpu.reciprocal %91 {approx = true} : vector<8x1xf32> -> vector<8x1xf32>
    %93 = vector.broadcast %92 : vector<8x1xf32> to vector<8x8xf32>
    %94 = arith.mulf %89, %93 : vector<8x8xf32>
    %cst_32 = arith.constant dense<0.000000e+00> : vector<8x8xf32>
    %95 = tpu.matmul %94, %80, %cst_32 {dimension_numbers = #tpu.dot_dimension_numbers<[1], [0], [0], [1], [0, 0, 1, 1], [], []>} : vector<8x8xf32>, vector<8x8xf32>, vector<8x8xf32> -> vector<8x8xf32>
    %96 = vector.extract_strided_slice %39 {offsets = [0, 24], sizes = [8, 8], strides = [1, 1]} : vector<8x128xf32> to vector<8x8xf32>
    %97 = vector.extract_strided_slice %40 {offsets = [0, 24], sizes = [8, 8], strides = [1, 1]} : vector<8x128xf32> to vector<8x8xf32>
    %98 = vector.extract_strided_slice %41 {offsets = [0, 24], sizes = [8, 8], strides = [1, 1]} : vector<8x128xf32> to vector<8x8xf32>
    %cst_33 = arith.constant dense<0.000000e+00> : vector<8x8xf32>
    %99 = tpu.matmul %96, %97, %cst_33 {dimension_numbers = #tpu.dot_dimension_numbers<[1], [1], [0], [0], [0, 0, 1, 0], [], []>} : vector<8x8xf32>, vector<8x8xf32>, vector<8x8xf32> -> vector<8x8xf32>
    %cst_34 = arith.constant 0.353553385 : f32
    %100 = vector.broadcast %cst_34 : f32 to vector<8x8xf32>
    %101 = arith.mulf %99, %100 : vector<8x8xf32>
    %102 = arith.addf %101, %31 : vector<8x8xf32>
    %cst_35 = arith.constant dense<0xFF800000> : vector<8xf32>
    %103 = vector.multi_reduction <maximumf>, %102, %cst_35 [1] : vector<8x8xf32> to vector<8xf32>
    %104 = vector.shape_cast %103 : vector<8xf32> to vector<8x1xf32>
    %105 = vector.broadcast %104 : vector<8x1xf32> to vector<8x8xf32>
    %106 = arith.subf %102, %105 : vector<8x8xf32>
    %107 = math.exp %106 : vector<8x8xf32>
    %cst_36 = arith.constant dense<0.000000e+00> : vector<8xf32>
    %108 = vector.multi_reduction <add>, %107, %cst_36 [1] : vector<8x8xf32> to vector<8xf32>
    %109 = vector.shape_cast %108 : vector<8xf32> to vector<8x1xf32>
    %110 = tpu.reciprocal %109 {approx = true} : vector<8x1xf32> -> vector<8x1xf32>
    %111 = vector.broadcast %110 : vector<8x1xf32> to vector<8x8xf32>
    %112 = arith.mulf %107, %111 : vector<8x8xf32>
    %cst_37 = arith.constant dense<0.000000e+00> : vector<8x8xf32>
    %113 = tpu.matmul %112, %98, %cst_37 {dimension_numbers = #tpu.dot_dimension_numbers<[1], [0], [0], [1], [0, 0, 1, 1], [], []>} : vector<8x8xf32>, vector<8x8xf32>, vector<8x8xf32> -> vector<8x8xf32>
    %114 = tpu.concatenate %59, %77, %95, %113 in 1 : vector<8x8xf32>, vector<8x8xf32>, vector<8x8xf32>, vector<8x8xf32> -> vector<8x32xf32>
    %c0_38 = arith.constant 0 : index
    %c0_39 = arith.constant 0 : index
    %c0_40 = arith.constant 0 : index
    %115 = vector.load %arg6[%c0_38, %c0_39, %c0_40] : memref<2x32x128xf32, #tpu.memory_space<vmem>>, vector<1x32x128xf32>
    %116 = vector.shape_cast %115 : vector<1x32x128xf32> to vector<32x128xf32>
    %cst_41 = arith.constant dense<0.000000e+00> : vector<8x128xf32>
    %117 = tpu.matmul %114, %116, %cst_41 {dimension_numbers = #tpu.dot_dimension_numbers<[1], [0], [0], [1], [0, 0, 1, 1], [], []>} : vector<8x32xf32>, vector<32x128xf32>, vector<8x128xf32> -> vector<8x128xf32>
    %c0_42 = arith.constant 0 : index
    %c0_43 = arith.constant 0 : index
    %c0_44 = arith.constant 0 : index
    %118 = vector.load %arg7[%c0_42, %c0_43, %c0_44] : memref<2x1x128xf32, #tpu.memory_space<vmem>>, vector<1x1x128xf32>
    %119 = vector.shape_cast %118 : vector<1x1x128xf32> to vector<1x128xf32>
    %120 = vector.broadcast %119 : vector<1x128xf32> to vector<8x128xf32>
    %121 = arith.addf %117, %120 : vector<8x128xf32>
    %122 = arith.addf %28, %121 : vector<8x128xf32>
    %c0_45 = arith.constant 0 : index
    %c0_46 = arith.constant 0 : index
    %c0_47 = arith.constant 0 : index
    %123 = vector.load %arg8[%c0_45, %c0_46, %c0_47] : memref<2x1x128xf32, #tpu.memory_space<vmem>>, vector<1x1x128xf32>
    %124 = vector.shape_cast %123 : vector<1x1x128xf32> to vector<1x128xf32>
    %c0_48 = arith.constant 0 : index
    %c0_49 = arith.constant 0 : index
    %c0_50 = arith.constant 0 : index
    %125 = vector.load %arg9[%c0_48, %c0_49, %c0_50] : memref<2x1x128xf32, #tpu.memory_space<vmem>>, vector<1x1x128xf32>
    %126 = vector.shape_cast %125 : vector<1x1x128xf32> to vector<1x128xf32>
    %cst_51 = arith.constant dense<0.000000e+00> : vector<8xf32>
    %127 = vector.multi_reduction <add>, %122, %cst_51 [1] : vector<8x128xf32> to vector<8xf32>
    %128 = vector.shape_cast %127 : vector<8xf32> to vector<8x1xf32>
    %cst_52 = arith.constant 3.125000e-02 : f32
    %129 = vector.broadcast %cst_52 : f32 to vector<8x1xf32>
    %130 = arith.mulf %128, %129 : vector<8x1xf32>
    %131 = vector.broadcast %130 : vector<8x1xf32> to vector<8x128xf32>
    %132 = arith.subf %122, %131 : vector<8x128xf32>
    %133 = arith.mulf %132, %4 : vector<8x128xf32>
    %134 = arith.mulf %133, %133 : vector<8x128xf32>
    %cst_53 = arith.constant dense<0.000000e+00> : vector<8xf32>
    %135 = vector.multi_reduction <add>, %134, %cst_53 [1] : vector<8x128xf32> to vector<8xf32>
    %136 = vector.shape_cast %135 : vector<8xf32> to vector<8x1xf32>
    %cst_54 = arith.constant 3.125000e-02 : f32
    %137 = vector.broadcast %cst_54 : f32 to vector<8x1xf32>
    %138 = arith.mulf %136, %137 : vector<8x1xf32>
    %cst_55 = arith.constant 9.99999996E-13 : f32
    %139 = vector.broadcast %cst_55 : f32 to vector<8x1xf32>
    %140 = arith.addf %138, %139 : vector<8x1xf32>
    %141 = math.rsqrt %140 : vector<8x1xf32>
    %142 = vector.broadcast %141 : vector<8x1xf32> to vector<8x128xf32>
    %143 = arith.mulf %133, %142 : vector<8x128xf32>
    %144 = vector.broadcast %124 : vector<1x128xf32> to vector<8x128xf32>
    %145 = arith.mulf %143, %144 : vector<8x128xf32>
    %146 = vector.broadcast %126 : vector<1x128xf32> to vector<8x128xf32>
    %147 = arith.addf %145, %146 : vector<8x128xf32>
    %c0_56 = arith.constant 0 : index
    %c0_57 = arith.constant 0 : index
    %c0_58 = arith.constant 0 : index
    %148 = vector.load %arg10[%c0_56, %c0_57, %c0_58] : memref<2x128x128xf32, #tpu.memory_space<vmem>>, vector<1x128x128xf32>
    %149 = vector.shape_cast %148 : vector<1x128x128xf32> to vector<128x128xf32>
    %cst_59 = arith.constant dense<0.000000e+00> : vector<8x128xf32>
    %150 = tpu.matmul %147, %149, %cst_59 {dimension_numbers = #tpu.dot_dimension_numbers<[1], [0], [0], [1], [0, 0, 1, 1], [], []>} : vector<8x128xf32>, vector<128x128xf32>, vector<8x128xf32> -> vector<8x128xf32>
    %c0_60 = arith.constant 0 : index
    %c0_61 = arith.constant 0 : index
    %c0_62 = arith.constant 0 : index
    %151 = vector.load %arg11[%c0_60, %c0_61, %c0_62] : memref<2x1x128xf32, #tpu.memory_space<vmem>>, vector<1x1x128xf32>
    %152 = vector.shape_cast %151 : vector<1x1x128xf32> to vector<1x128xf32>
    %153 = vector.broadcast %152 : vector<1x128xf32> to vector<8x128xf32>
    %154 = arith.addf %150, %153 : vector<8x128xf32>
    %cst_63 = arith.constant 5.000000e-01 : f32
    %155 = vector.broadcast %cst_63 : f32 to vector<8x128xf32>
    %156 = arith.mulf %155, %154 : vector<8x128xf32>
    %cst_64 = arith.constant 4.471500e-02 : f32
    %157 = vector.broadcast %cst_64 : f32 to vector<8x128xf32>
    %158 = arith.mulf %157, %154 : vector<8x128xf32>
    %159 = arith.mulf %158, %154 : vector<8x128xf32>
    %160 = arith.mulf %159, %154 : vector<8x128xf32>
    %161 = arith.addf %154, %160 : vector<8x128xf32>
    %cst_65 = arith.constant 0.797884583 : f32
    %162 = vector.broadcast %cst_65 : f32 to vector<8x128xf32>
    %163 = arith.mulf %162, %161 : vector<8x128xf32>
    %164 = math.tanh %163 : vector<8x128xf32>
    %cst_66 = arith.constant 1.000000e+00 : f32
    %165 = vector.broadcast %cst_66 : f32 to vector<8x128xf32>
    %166 = arith.addf %165, %164 : vector<8x128xf32>
    %167 = arith.mulf %156, %166 : vector<8x128xf32>
    %c0_67 = arith.constant 0 : index
    %c0_68 = arith.constant 0 : index
    %c0_69 = arith.constant 0 : index
    %168 = vector.load %arg12[%c0_67, %c0_68, %c0_69] : memref<2x128x128xf32, #tpu.memory_space<vmem>>, vector<1x128x128xf32>
    %169 = vector.shape_cast %168 : vector<1x128x128xf32> to vector<128x128xf32>
    %cst_70 = arith.constant dense<0.000000e+00> : vector<8x128xf32>
    %170 = tpu.matmul %167, %169, %cst_70 {dimension_numbers = #tpu.dot_dimension_numbers<[1], [0], [0], [1], [0, 0, 1, 1], [], []>} : vector<8x128xf32>, vector<128x128xf32>, vector<8x128xf32> -> vector<8x128xf32>
    %c0_71 = arith.constant 0 : index
    %c0_72 = arith.constant 0 : index
    %c0_73 = arith.constant 0 : index
    %171 = vector.load %arg13[%c0_71, %c0_72, %c0_73] : memref<2x1x128xf32, #tpu.memory_space<vmem>>, vector<1x1x128xf32>
    %172 = vector.shape_cast %171 : vector<1x1x128xf32> to vector<1x128xf32>
    %173 = vector.broadcast %172 : vector<1x128xf32> to vector<8x128xf32>
    %174 = arith.addf %170, %173 : vector<8x128xf32>
    %175 = arith.addf %147, %174 : vector<8x128xf32>
    %c0_74 = arith.constant 0 : index
    %c0_75 = arith.constant 0 : index
    %c0_76 = arith.constant 0 : index
    %176 = vector.load %arg14[%c0_74, %c0_75, %c0_76] : memref<2x1x128xf32, #tpu.memory_space<vmem>>, vector<1x1x128xf32>
    %177 = vector.shape_cast %176 : vector<1x1x128xf32> to vector<1x128xf32>
    %c0_77 = arith.constant 0 : index
    %c0_78 = arith.constant 0 : index
    %c0_79 = arith.constant 0 : index
    %178 = vector.load %arg15[%c0_77, %c0_78, %c0_79] : memref<2x1x128xf32, #tpu.memory_space<vmem>>, vector<1x1x128xf32>
    %179 = vector.shape_cast %178 : vector<1x1x128xf32> to vector<1x128xf32>
    %cst_80 = arith.constant dense<0.000000e+00> : vector<8xf32>
    %180 = vector.multi_reduction <add>, %175, %cst_80 [1] : vector<8x128xf32> to vector<8xf32>
    %181 = vector.shape_cast %180 : vector<8xf32> to vector<8x1xf32>
    %cst_81 = arith.constant 3.125000e-02 : f32
    %182 = vector.broadcast %cst_81 : f32 to vector<8x1xf32>
    %183 = arith.mulf %181, %182 : vector<8x1xf32>
    %184 = vector.broadcast %183 : vector<8x1xf32> to vector<8x128xf32>
    %185 = arith.subf %175, %184 : vector<8x128xf32>
    %186 = arith.mulf %185, %4 : vector<8x128xf32>
    %187 = arith.mulf %186, %186 : vector<8x128xf32>
    %cst_82 = arith.constant dense<0.000000e+00> : vector<8xf32>
    %188 = vector.multi_reduction <add>, %187, %cst_82 [1] : vector<8x128xf32> to vector<8xf32>
    %189 = vector.shape_cast %188 : vector<8xf32> to vector<8x1xf32>
    %cst_83 = arith.constant 3.125000e-02 : f32
    %190 = vector.broadcast %cst_83 : f32 to vector<8x1xf32>
    %191 = arith.mulf %189, %190 : vector<8x1xf32>
    %cst_84 = arith.constant 9.99999996E-13 : f32
    %192 = vector.broadcast %cst_84 : f32 to vector<8x1xf32>
    %193 = arith.addf %191, %192 : vector<8x1xf32>
    %194 = math.rsqrt %193 : vector<8x1xf32>
    %195 = vector.broadcast %194 : vector<8x1xf32> to vector<8x128xf32>
    %196 = arith.mulf %186, %195 : vector<8x128xf32>
    %197 = vector.broadcast %177 : vector<1x128xf32> to vector<8x128xf32>
    %198 = arith.mulf %196, %197 : vector<8x128xf32>
    %199 = vector.broadcast %179 : vector<1x128xf32> to vector<8x128xf32>
    %200 = arith.addf %198, %199 : vector<8x128xf32>
    %c1 = arith.constant 1 : index
    %c0_85 = arith.constant 0 : index
    %c0_86 = arith.constant 0 : index
    %201 = vector.load %arg4[%c1, %c0_85, %c0_86] : memref<2x128x384xf32, #tpu.memory_space<vmem>>, vector<1x128x384xf32>
    %202 = vector.shape_cast %201 : vector<1x128x384xf32> to vector<128x384xf32>
    %cst_87 = arith.constant dense<0.000000e+00> : vector<8x384xf32>
    %203 = tpu.matmul %200, %202, %cst_87 {dimension_numbers = #tpu.dot_dimension_numbers<[1], [0], [0], [1], [0, 0, 1, 1], [], []>} : vector<8x128xf32>, vector<128x384xf32>, vector<8x384xf32> -> vector<8x384xf32>
    %c1_88 = arith.constant 1 : index
    %c0_89 = arith.constant 0 : index
    %c0_90 = arith.constant 0 : index
    %204 = vector.load %arg5[%c1_88, %c0_89, %c0_90] : memref<2x1x384xf32, #tpu.memory_space<vmem>>, vector<1x1x384xf32>
    %205 = vector.shape_cast %204 : vector<1x1x384xf32> to vector<1x384xf32>
    %206 = vector.broadcast %205 : vector<1x384xf32> to vector<8x384xf32>
    %207 = arith.addf %203, %206 : vector<8x384xf32>
    %208 = vector.extract_strided_slice %207 {offsets = [0, 0], sizes = [8, 128], strides = [1, 1]} : vector<8x384xf32> to vector<8x128xf32>
    %209 = vector.extract_strided_slice %207 {offsets = [0, 128], sizes = [8, 128], strides = [1, 1]} : vector<8x384xf32> to vector<8x128xf32>
    %210 = vector.extract_strided_slice %207 {offsets = [0, 256], sizes = [8, 128], strides = [1, 1]} : vector<8x384xf32> to vector<8x128xf32>
    %211 = vector.extract_strided_slice %208 {offsets = [0, 0], sizes = [8, 8], strides = [1, 1]} : vector<8x128xf32> to vector<8x8xf32>
    %212 = vector.extract_strided_slice %209 {offsets = [0, 0], sizes = [8, 8], strides = [1, 1]} : vector<8x128xf32> to vector<8x8xf32>
    %213 = vector.extract_strided_slice %210 {offsets = [0, 0], sizes = [8, 8], strides = [1, 1]} : vector<8x128xf32> to vector<8x8xf32>
    %cst_91 = arith.constant dense<0.000000e+00> : vector<8x8xf32>
    %214 = tpu.matmul %211, %212, %cst_91 {dimension_numbers = #tpu.dot_dimension_numbers<[1], [1], [0], [0], [0, 0, 1, 0], [], []>} : vector<8x8xf32>, vector<8x8xf32>, vector<8x8xf32> -> vector<8x8xf32>
    %cst_92 = arith.constant 0.353553385 : f32
    %215 = vector.broadcast %cst_92 : f32 to vector<8x8xf32>
    %216 = arith.mulf %214, %215 : vector<8x8xf32>
    %217 = arith.addf %216, %31 : vector<8x8xf32>
    %cst_93 = arith.constant dense<0xFF800000> : vector<8xf32>
    %218 = vector.multi_reduction <maximumf>, %217, %cst_93 [1] : vector<8x8xf32> to vector<8xf32>
    %219 = vector.shape_cast %218 : vector<8xf32> to vector<8x1xf32>
    %220 = vector.broadcast %219 : vector<8x1xf32> to vector<8x8xf32>
    %221 = arith.subf %217, %220 : vector<8x8xf32>
    %222 = math.exp %221 : vector<8x8xf32>
    %cst_94 = arith.constant dense<0.000000e+00> : vector<8xf32>
    %223 = vector.multi_reduction <add>, %222, %cst_94 [1] : vector<8x8xf32> to vector<8xf32>
    %224 = vector.shape_cast %223 : vector<8xf32> to vector<8x1xf32>
    %225 = tpu.reciprocal %224 {approx = true} : vector<8x1xf32> -> vector<8x1xf32>
    %226 = vector.broadcast %225 : vector<8x1xf32> to vector<8x8xf32>
    %227 = arith.mulf %222, %226 : vector<8x8xf32>
    %cst_95 = arith.constant dense<0.000000e+00> : vector<8x8xf32>
    %228 = tpu.matmul %227, %213, %cst_95 {dimension_numbers = #tpu.dot_dimension_numbers<[1], [0], [0], [1], [0, 0, 1, 1], [], []>} : vector<8x8xf32>, vector<8x8xf32>, vector<8x8xf32> -> vector<8x8xf32>
    %229 = vector.extract_strided_slice %208 {offsets = [0, 8], sizes = [8, 8], strides = [1, 1]} : vector<8x128xf32> to vector<8x8xf32>
    %230 = vector.extract_strided_slice %209 {offsets = [0, 8], sizes = [8, 8], strides = [1, 1]} : vector<8x128xf32> to vector<8x8xf32>
    %231 = vector.extract_strided_slice %210 {offsets = [0, 8], sizes = [8, 8], strides = [1, 1]} : vector<8x128xf32> to vector<8x8xf32>
    %cst_96 = arith.constant dense<0.000000e+00> : vector<8x8xf32>
    %232 = tpu.matmul %229, %230, %cst_96 {dimension_numbers = #tpu.dot_dimension_numbers<[1], [1], [0], [0], [0, 0, 1, 0], [], []>} : vector<8x8xf32>, vector<8x8xf32>, vector<8x8xf32> -> vector<8x8xf32>
    %cst_97 = arith.constant 0.353553385 : f32
    %233 = vector.broadcast %cst_97 : f32 to vector<8x8xf32>
    %234 = arith.mulf %232, %233 : vector<8x8xf32>
    %235 = arith.addf %234, %31 : vector<8x8xf32>
    %cst_98 = arith.constant dense<0xFF800000> : vector<8xf32>
    %236 = vector.multi_reduction <maximumf>, %235, %cst_98 [1] : vector<8x8xf32> to vector<8xf32>
    %237 = vector.shape_cast %236 : vector<8xf32> to vector<8x1xf32>
    %238 = vector.broadcast %237 : vector<8x1xf32> to vector<8x8xf32>
    %239 = arith.subf %235, %238 : vector<8x8xf32>
    %240 = math.exp %239 : vector<8x8xf32>
    %cst_99 = arith.constant dense<0.000000e+00> : vector<8xf32>
    %241 = vector.multi_reduction <add>, %240, %cst_99 [1] : vector<8x8xf32> to vector<8xf32>
    %242 = vector.shape_cast %241 : vector<8xf32> to vector<8x1xf32>
    %243 = tpu.reciprocal %242 {approx = true} : vector<8x1xf32> -> vector<8x1xf32>
    %244 = vector.broadcast %243 : vector<8x1xf32> to vector<8x8xf32>
    %245 = arith.mulf %240, %244 : vector<8x8xf32>
    %cst_100 = arith.constant dense<0.000000e+00> : vector<8x8xf32>
    %246 = tpu.matmul %245, %231, %cst_100 {dimension_numbers = #tpu.dot_dimension_numbers<[1], [0], [0], [1], [0, 0, 1, 1], [], []>} : vector<8x8xf32>, vector<8x8xf32>, vector<8x8xf32> -> vector<8x8xf32>
    %247 = vector.extract_strided_slice %208 {offsets = [0, 16], sizes = [8, 8], strides = [1, 1]} : vector<8x128xf32> to vector<8x8xf32>
    %248 = vector.extract_strided_slice %209 {offsets = [0, 16], sizes = [8, 8], strides = [1, 1]} : vector<8x128xf32> to vector<8x8xf32>
    %249 = vector.extract_strided_slice %210 {offsets = [0, 16], sizes = [8, 8], strides = [1, 1]} : vector<8x128xf32> to vector<8x8xf32>
    %cst_101 = arith.constant dense<0.000000e+00> : vector<8x8xf32>
    %250 = tpu.matmul %247, %248, %cst_101 {dimension_numbers = #tpu.dot_dimension_numbers<[1], [1], [0], [0], [0, 0, 1, 0], [], []>} : vector<8x8xf32>, vector<8x8xf32>, vector<8x8xf32> -> vector<8x8xf32>
    %cst_102 = arith.constant 0.353553385 : f32
    %251 = vector.broadcast %cst_102 : f32 to vector<8x8xf32>
    %252 = arith.mulf %250, %251 : vector<8x8xf32>
    %253 = arith.addf %252, %31 : vector<8x8xf32>
    %cst_103 = arith.constant dense<0xFF800000> : vector<8xf32>
    %254 = vector.multi_reduction <maximumf>, %253, %cst_103 [1] : vector<8x8xf32> to vector<8xf32>
    %255 = vector.shape_cast %254 : vector<8xf32> to vector<8x1xf32>
    %256 = vector.broadcast %255 : vector<8x1xf32> to vector<8x8xf32>
    %257 = arith.subf %253, %256 : vector<8x8xf32>
    %258 = math.exp %257 : vector<8x8xf32>
    %cst_104 = arith.constant dense<0.000000e+00> : vector<8xf32>
    %259 = vector.multi_reduction <add>, %258, %cst_104 [1] : vector<8x8xf32> to vector<8xf32>
    %260 = vector.shape_cast %259 : vector<8xf32> to vector<8x1xf32>
    %261 = tpu.reciprocal %260 {approx = true} : vector<8x1xf32> -> vector<8x1xf32>
    %262 = vector.broadcast %261 : vector<8x1xf32> to vector<8x8xf32>
    %263 = arith.mulf %258, %262 : vector<8x8xf32>
    %cst_105 = arith.constant dense<0.000000e+00> : vector<8x8xf32>
    %264 = tpu.matmul %263, %249, %cst_105 {dimension_numbers = #tpu.dot_dimension_numbers<[1], [0], [0], [1], [0, 0, 1, 1], [], []>} : vector<8x8xf32>, vector<8x8xf32>, vector<8x8xf32> -> vector<8x8xf32>
    %265 = vector.extract_strided_slice %208 {offsets = [0, 24], sizes = [8, 8], strides = [1, 1]} : vector<8x128xf32> to vector<8x8xf32>
    %266 = vector.extract_strided_slice %209 {offsets = [0, 24], sizes = [8, 8], strides = [1, 1]} : vector<8x128xf32> to vector<8x8xf32>
    %267 = vector.extract_strided_slice %210 {offsets = [0, 24], sizes = [8, 8], strides = [1, 1]} : vector<8x128xf32> to vector<8x8xf32>
    %cst_106 = arith.constant dense<0.000000e+00> : vector<8x8xf32>
    %268 = tpu.matmul %265, %266, %cst_106 {dimension_numbers = #tpu.dot_dimension_numbers<[1], [1], [0], [0], [0, 0, 1, 0], [], []>} : vector<8x8xf32>, vector<8x8xf32>, vector<8x8xf32> -> vector<8x8xf32>
    %cst_107 = arith.constant 0.353553385 : f32
    %269 = vector.broadcast %cst_107 : f32 to vector<8x8xf32>
    %270 = arith.mulf %268, %269 : vector<8x8xf32>
    %271 = arith.addf %270, %31 : vector<8x8xf32>
    %cst_108 = arith.constant dense<0xFF800000> : vector<8xf32>
    %272 = vector.multi_reduction <maximumf>, %271, %cst_108 [1] : vector<8x8xf32> to vector<8xf32>
    %273 = vector.shape_cast %272 : vector<8xf32> to vector<8x1xf32>
    %274 = vector.broadcast %273 : vector<8x1xf32> to vector<8x8xf32>
    %275 = arith.subf %271, %274 : vector<8x8xf32>
    %276 = math.exp %275 : vector<8x8xf32>
    %cst_109 = arith.constant dense<0.000000e+00> : vector<8xf32>
    %277 = vector.multi_reduction <add>, %276, %cst_109 [1] : vector<8x8xf32> to vector<8xf32>
    %278 = vector.shape_cast %277 : vector<8xf32> to vector<8x1xf32>
    %279 = tpu.reciprocal %278 {approx = true} : vector<8x1xf32> -> vector<8x1xf32>
    %280 = vector.broadcast %279 : vector<8x1xf32> to vector<8x8xf32>
    %281 = arith.mulf %276, %280 : vector<8x8xf32>
    %cst_110 = arith.constant dense<0.000000e+00> : vector<8x8xf32>
    %282 = tpu.matmul %281, %267, %cst_110 {dimension_numbers = #tpu.dot_dimension_numbers<[1], [0], [0], [1], [0, 0, 1, 1], [], []>} : vector<8x8xf32>, vector<8x8xf32>, vector<8x8xf32> -> vector<8x8xf32>
    %283 = tpu.concatenate %228, %246, %264, %282 in 1 : vector<8x8xf32>, vector<8x8xf32>, vector<8x8xf32>, vector<8x8xf32> -> vector<8x32xf32>
    %c1_111 = arith.constant 1 : index
    %c0_112 = arith.constant 0 : index
    %c0_113 = arith.constant 0 : index
    %284 = vector.load %arg6[%c1_111, %c0_112, %c0_113] : memref<2x32x128xf32, #tpu.memory_space<vmem>>, vector<1x32x128xf32>
    %285 = vector.shape_cast %284 : vector<1x32x128xf32> to vector<32x128xf32>
    %cst_114 = arith.constant dense<0.000000e+00> : vector<8x128xf32>
    %286 = tpu.matmul %283, %285, %cst_114 {dimension_numbers = #tpu.dot_dimension_numbers<[1], [0], [0], [1], [0, 0, 1, 1], [], []>} : vector<8x32xf32>, vector<32x128xf32>, vector<8x128xf32> -> vector<8x128xf32>
    %c1_115 = arith.constant 1 : index
    %c0_116 = arith.constant 0 : index
    %c0_117 = arith.constant 0 : index
    %287 = vector.load %arg7[%c1_115, %c0_116, %c0_117] : memref<2x1x128xf32, #tpu.memory_space<vmem>>, vector<1x1x128xf32>
    %288 = vector.shape_cast %287 : vector<1x1x128xf32> to vector<1x128xf32>
    %289 = vector.broadcast %288 : vector<1x128xf32> to vector<8x128xf32>
    %290 = arith.addf %286, %289 : vector<8x128xf32>
    %291 = arith.addf %200, %290 : vector<8x128xf32>
    %c1_118 = arith.constant 1 : index
    %c0_119 = arith.constant 0 : index
    %c0_120 = arith.constant 0 : index
    %292 = vector.load %arg8[%c1_118, %c0_119, %c0_120] : memref<2x1x128xf32, #tpu.memory_space<vmem>>, vector<1x1x128xf32>
    %293 = vector.shape_cast %292 : vector<1x1x128xf32> to vector<1x128xf32>
    %c1_121 = arith.constant 1 : index
    %c0_122 = arith.constant 0 : index
    %c0_123 = arith.constant 0 : index
    %294 = vector.load %arg9[%c1_121, %c0_122, %c0_123] : memref<2x1x128xf32, #tpu.memory_space<vmem>>, vector<1x1x128xf32>
    %295 = vector.shape_cast %294 : vector<1x1x128xf32> to vector<1x128xf32>
    %cst_124 = arith.constant dense<0.000000e+00> : vector<8xf32>
    %296 = vector.multi_reduction <add>, %291, %cst_124 [1] : vector<8x128xf32> to vector<8xf32>
    %297 = vector.shape_cast %296 : vector<8xf32> to vector<8x1xf32>
    %cst_125 = arith.constant 3.125000e-02 : f32
    %298 = vector.broadcast %cst_125 : f32 to vector<8x1xf32>
    %299 = arith.mulf %297, %298 : vector<8x1xf32>
    %300 = vector.broadcast %299 : vector<8x1xf32> to vector<8x128xf32>
    %301 = arith.subf %291, %300 : vector<8x128xf32>
    %302 = arith.mulf %301, %4 : vector<8x128xf32>
    %303 = arith.mulf %302, %302 : vector<8x128xf32>
    %cst_126 = arith.constant dense<0.000000e+00> : vector<8xf32>
    %304 = vector.multi_reduction <add>, %303, %cst_126 [1] : vector<8x128xf32> to vector<8xf32>
    %305 = vector.shape_cast %304 : vector<8xf32> to vector<8x1xf32>
    %cst_127 = arith.constant 3.125000e-02 : f32
    %306 = vector.broadcast %cst_127 : f32 to vector<8x1xf32>
    %307 = arith.mulf %305, %306 : vector<8x1xf32>
    %cst_128 = arith.constant 9.99999996E-13 : f32
    %308 = vector.broadcast %cst_128 : f32 to vector<8x1xf32>
    %309 = arith.addf %307, %308 : vector<8x1xf32>
    %310 = math.rsqrt %309 : vector<8x1xf32>
    %311 = vector.broadcast %310 : vector<8x1xf32> to vector<8x128xf32>
    %312 = arith.mulf %302, %311 : vector<8x128xf32>
    %313 = vector.broadcast %293 : vector<1x128xf32> to vector<8x128xf32>
    %314 = arith.mulf %312, %313 : vector<8x128xf32>
    %315 = vector.broadcast %295 : vector<1x128xf32> to vector<8x128xf32>
    %316 = arith.addf %314, %315 : vector<8x128xf32>
    %c1_129 = arith.constant 1 : index
    %c0_130 = arith.constant 0 : index
    %c0_131 = arith.constant 0 : index
    %317 = vector.load %arg10[%c1_129, %c0_130, %c0_131] : memref<2x128x128xf32, #tpu.memory_space<vmem>>, vector<1x128x128xf32>
    %318 = vector.shape_cast %317 : vector<1x128x128xf32> to vector<128x128xf32>
    %cst_132 = arith.constant dense<0.000000e+00> : vector<8x128xf32>
    %319 = tpu.matmul %316, %318, %cst_132 {dimension_numbers = #tpu.dot_dimension_numbers<[1], [0], [0], [1], [0, 0, 1, 1], [], []>} : vector<8x128xf32>, vector<128x128xf32>, vector<8x128xf32> -> vector<8x128xf32>
    %c1_133 = arith.constant 1 : index
    %c0_134 = arith.constant 0 : index
    %c0_135 = arith.constant 0 : index
    %320 = vector.load %arg11[%c1_133, %c0_134, %c0_135] : memref<2x1x128xf32, #tpu.memory_space<vmem>>, vector<1x1x128xf32>
    %321 = vector.shape_cast %320 : vector<1x1x128xf32> to vector<1x128xf32>
    %322 = vector.broadcast %321 : vector<1x128xf32> to vector<8x128xf32>
    %323 = arith.addf %319, %322 : vector<8x128xf32>
    %cst_136 = arith.constant 5.000000e-01 : f32
    %324 = vector.broadcast %cst_136 : f32 to vector<8x128xf32>
    %325 = arith.mulf %324, %323 : vector<8x128xf32>
    %cst_137 = arith.constant 4.471500e-02 : f32
    %326 = vector.broadcast %cst_137 : f32 to vector<8x128xf32>
    %327 = arith.mulf %326, %323 : vector<8x128xf32>
    %328 = arith.mulf %327, %323 : vector<8x128xf32>
    %329 = arith.mulf %328, %323 : vector<8x128xf32>
    %330 = arith.addf %323, %329 : vector<8x128xf32>
    %cst_138 = arith.constant 0.797884583 : f32
    %331 = vector.broadcast %cst_138 : f32 to vector<8x128xf32>
    %332 = arith.mulf %331, %330 : vector<8x128xf32>
    %333 = math.tanh %332 : vector<8x128xf32>
    %cst_139 = arith.constant 1.000000e+00 : f32
    %334 = vector.broadcast %cst_139 : f32 to vector<8x128xf32>
    %335 = arith.addf %334, %333 : vector<8x128xf32>
    %336 = arith.mulf %325, %335 : vector<8x128xf32>
    %c1_140 = arith.constant 1 : index
    %c0_141 = arith.constant 0 : index
    %c0_142 = arith.constant 0 : index
    %337 = vector.load %arg12[%c1_140, %c0_141, %c0_142] : memref<2x128x128xf32, #tpu.memory_space<vmem>>, vector<1x128x128xf32>
    %338 = vector.shape_cast %337 : vector<1x128x128xf32> to vector<128x128xf32>
    %cst_143 = arith.constant dense<0.000000e+00> : vector<8x128xf32>
    %339 = tpu.matmul %336, %338, %cst_143 {dimension_numbers = #tpu.dot_dimension_numbers<[1], [0], [0], [1], [0, 0, 1, 1], [], []>} : vector<8x128xf32>, vector<128x128xf32>, vector<8x128xf32> -> vector<8x128xf32>
    %c1_144 = arith.constant 1 : index
    %c0_145 = arith.constant 0 : index
    %c0_146 = arith.constant 0 : index
    %340 = vector.load %arg13[%c1_144, %c0_145, %c0_146] : memref<2x1x128xf32, #tpu.memory_space<vmem>>, vector<1x1x128xf32>
    %341 = vector.shape_cast %340 : vector<1x1x128xf32> to vector<1x128xf32>
    %342 = vector.broadcast %341 : vector<1x128xf32> to vector<8x128xf32>
    %343 = arith.addf %339, %342 : vector<8x128xf32>
    %344 = arith.addf %316, %343 : vector<8x128xf32>
    %c1_147 = arith.constant 1 : index
    %c0_148 = arith.constant 0 : index
    %c0_149 = arith.constant 0 : index
    %345 = vector.load %arg14[%c1_147, %c0_148, %c0_149] : memref<2x1x128xf32, #tpu.memory_space<vmem>>, vector<1x1x128xf32>
    %346 = vector.shape_cast %345 : vector<1x1x128xf32> to vector<1x128xf32>
    %c1_150 = arith.constant 1 : index
    %c0_151 = arith.constant 0 : index
    %c0_152 = arith.constant 0 : index
    %347 = vector.load %arg15[%c1_150, %c0_151, %c0_152] : memref<2x1x128xf32, #tpu.memory_space<vmem>>, vector<1x1x128xf32>
    %348 = vector.shape_cast %347 : vector<1x1x128xf32> to vector<1x128xf32>
    %cst_153 = arith.constant dense<0.000000e+00> : vector<8xf32>
    %349 = vector.multi_reduction <add>, %344, %cst_153 [1] : vector<8x128xf32> to vector<8xf32>
    %350 = vector.shape_cast %349 : vector<8xf32> to vector<8x1xf32>
    %cst_154 = arith.constant 3.125000e-02 : f32
    %351 = vector.broadcast %cst_154 : f32 to vector<8x1xf32>
    %352 = arith.mulf %350, %351 : vector<8x1xf32>
    %353 = vector.broadcast %352 : vector<8x1xf32> to vector<8x128xf32>
    %354 = arith.subf %344, %353 : vector<8x128xf32>
    %355 = arith.mulf %354, %4 : vector<8x128xf32>
    %356 = arith.mulf %355, %355 : vector<8x128xf32>
    %cst_155 = arith.constant dense<0.000000e+00> : vector<8xf32>
    %357 = vector.multi_reduction <add>, %356, %cst_155 [1] : vector<8x128xf32> to vector<8xf32>
    %358 = vector.shape_cast %357 : vector<8xf32> to vector<8x1xf32>
    %cst_156 = arith.constant 3.125000e-02 : f32
    %359 = vector.broadcast %cst_156 : f32 to vector<8x1xf32>
    %360 = arith.mulf %358, %359 : vector<8x1xf32>
    %cst_157 = arith.constant 9.99999996E-13 : f32
    %361 = vector.broadcast %cst_157 : f32 to vector<8x1xf32>
    %362 = arith.addf %360, %361 : vector<8x1xf32>
    %363 = math.rsqrt %362 : vector<8x1xf32>
    %364 = vector.broadcast %363 : vector<8x1xf32> to vector<8x128xf32>
    %365 = arith.mulf %355, %364 : vector<8x128xf32>
    %366 = vector.broadcast %346 : vector<1x128xf32> to vector<8x128xf32>
    %367 = arith.mulf %365, %366 : vector<8x128xf32>
    %368 = vector.broadcast %348 : vector<1x128xf32> to vector<8x128xf32>
    %369 = arith.addf %367, %368 : vector<8x128xf32>
    %370 = vector.extract_strided_slice %369 {offsets = [0, 0], sizes = [1, 128], strides = [1, 1]} : vector<8x128xf32> to vector<1x128xf32>
    %371 = arith.mulf %370, %370 : vector<1x128xf32>
    %cst_158 = arith.constant dense<0.000000e+00> : vector<1xf32>
    %372 = vector.multi_reduction <add>, %371, %cst_158 [1] : vector<1x128xf32> to vector<1xf32>
    %373 = vector.shape_cast %372 : vector<1xf32> to vector<1x1xf32>
    %cst_159 = arith.constant 1.000000e-24 : f32
    %374 = vector.broadcast %cst_159 : f32 to vector<1x1xf32>
    %375 = arith.maximumf %373, %374 : vector<1x1xf32>
    %376 = math.rsqrt %375 : vector<1x1xf32>
    %377 = vector.broadcast %376 : vector<1x1xf32> to vector<1x128xf32>
    %378 = arith.mulf %370, %377 : vector<1x128xf32>
    %c0_160 = arith.constant 0 : index
    %c0_161 = arith.constant 0 : index
    %379 = vector.load %arg16[%c0_160, %c0_161] : memref<1x128xf32, #tpu.memory_space<vmem>>, vector<1x128xf32>
    tpu.vector_store %arg16[%c0_160, %c0_161], %378 {strides = array<i32>} : memref<1x128xf32, #tpu.memory_space<vmem>>, vector<1x128xf32>,
    return
  }
}

</mosaic_0001>

<llo_original>
// kernel: bge_forward.1
$region0: #{bge_forward.1}
  #allocation0 [shape = 'u32[]', space=smem, size = 0x4, offset = 0x4, fixed_abs, tag = 'smem constant byte address 0x4 - core index']
  #allocation1 [shape = 'u32[72,128]{1,0:T(1,128)}', space=vmem, size = 0x9000, scoped, tag = 'internal scratch']
  %s0 = inlined_call_operand.vmem [shape: f32[8,128], index: 0, kind: input, shape index: {}]
  %s1 = inlined_call_operand.vmem [shape: f32[1,8], index: 1, kind: input, shape index: {}]
  %s2 = inlined_call_operand.vmem [shape: f32[1,128], index: 2, kind: input, shape index: {}]
  %s3 = inlined_call_operand.vmem [shape: f32[1,128], index: 3, kind: input, shape index: {}]
  %s4 = inlined_call_operand.hbm [shape: f32[2,128,384], index: 4, kind: input, shape index: {}]
  %s5 = inlined_call_operand.vmem [shape: f32[2,1,384], index: 5, kind: input, shape index: {}]
  %s6 = inlined_call_operand.vmem [shape: f32[2,32,128], index: 6, kind: input, shape index: {}]
  %s7 = inlined_call_operand.vmem [shape: f32[2,1,128], index: 7, kind: input, shape index: {}]
  %s8 = inlined_call_operand.vmem [shape: f32[2,1,128], index: 8, kind: input, shape index: {}]
  %s9 = inlined_call_operand.vmem [shape: f32[2,1,128], index: 9, kind: input, shape index: {}]
  %s10 = inlined_call_operand.hbm [shape: f32[2,128,128], index: 10, kind: input, shape index: {}]
  %s11 = inlined_call_operand.vmem [shape: f32[2,1,128], index: 11, kind: input, shape index: {}]
  %s12 = inlined_call_operand.hbm [shape: f32[2,128,128], index: 12, kind: input, shape index: {}]
  %s13 = inlined_call_operand.vmem [shape: f32[2,1,128], index: 13, kind: input, shape index: {}]
  %s14 = inlined_call_operand.vmem [shape: f32[2,1,128], index: 14, kind: input, shape index: {}]
  %s15 = inlined_call_operand.vmem [shape: f32[2,1,128], index: 15, kind: input, shape index: {}]
  %s16 = inlined_call_operand.hbm [shape: f32[1,128], index: 16, kind: output, shape index: {}]
  %s17 = sld [smem:[#allocation0]]
  $region86: #{bge_forward.1} parent=0
    _
  %s19 = ssub.s32 1, %s17
  %s20 = scalar_select 0, %s19, %s17
  $region1: #{bge_forward.1} parent=0
    #allocation2 [shape = 'u8[393216]{0}', space=vmem, size = 0x60000, scoped, tag = 'input window, operand 4, single buffered']
    #allocation3 [shape = 's32[1]{0}', space=sflag, size = 0x4, scoped, tag = 'scoped memory for bge_forward.1']
    #allocation4 [shape = 's32[1]{0}', space=sflag, size = 0x4, scoped, tag = 'scoped memory for bge_forward.1']
    #allocation5 [shape = 'u8[131072]{0}', space=vmem, size = 0x20000, scoped, tag = 'input window, operand 10, single buffered']
    #allocation6 [shape = 's32[1]{0}', space=sflag, size = 0x4, scoped, tag = 'scoped memory for bge_forward.1']
    #allocation7 [shape = 'u8[131072]{0}', space=vmem, size = 0x20000, scoped, tag = 'input window, operand 12, single buffered']
    #allocation8 [shape = 'u8[512]{0}', space=vmem, size = 0x400, scoped, tag = 'output window, operand 0, single buffered']
    %21 = vsyncpa [#allocation3], 0
    %22 = vsyncpa [#allocation6], 0
    %23 = vsyncpa [#allocation4], 0
    // Predicated region
    $region2: #{bge_forward.1} parent=1 // pred_check
      _
    $region3: #{bge_forward.1} parent=1 // pred_check_branch
      %25 = sbr.rel (0) target = $region5
    $region4: #{bge_forward.1} parent=1 // pred_region
      _
    $region5: #{bge_forward.1} parent=1 // pred_fallthru
      _
    // Predicated region
    $region6: #{bge_forward.1} parent=1 // pred_check
      _
    $region7: #{bge_forward.1} parent=1 // pred_check_branch
      %27 = sbr.rel (0) target = $region9
    $region8: #{bge_forward.1} parent=1 // pred_region
      _
    $region9: #{bge_forward.1} parent=1 // pred_fallthru
      _
    // Predicated region
    $region10: #{bge_forward.1} parent=1 // pred_check
      _
    $region11: #{bge_forward.1} parent=1 // pred_check_branch
      %29 = sbr.rel (0) target = $region13
    $region12: #{bge_forward.1} parent=1 // pred_region
      _
    $region13: #{bge_forward.1} parent=1 // pred_fallthru
      _
    // Predicated region
    $region14: #{bge_forward.1} parent=1 // pred_check
      _
    $region15: #{bge_forward.1} parent=1 // pred_check_branch
      %31 = sbr.rel (0) target = $region17
    $region16: #{bge_forward.1} parent=1 // pred_region
      _
    $region17: #{bge_forward.1} parent=1 // pred_fallthru
      _
    // Predicated region
    $region18: #{bge_forward.1} parent=1 // pred_check
      _
    $region19: #{bge_forward.1} parent=1 // pred_check_branch
      %33 = sbr.rel (0) target = $region21
    $region20: #{bge_forward.1} parent=1 // pred_region
      %35 = vsyncadd [#allocation3], 0
      %s36 = sshll.u32 %s4, 4
      %s37 = int_to_ptr.hbm [resolvable:$true] %s36
      %s38 = sshll.u32 [#allocation2], 4
      %s39 = int_to_ptr.vmem [resolvable:$true] %s38
      %44 = dma.hbm_to_vmem [thread:$0]  %s37, 12288, %s39, [#allocation3], 384, 384, 24
    $region21: #{bge_forward.1} parent=1 // pred_fallthru
      _
    // Predicated region
    $region22: #{bge_forward.1} parent=1 // pred_check
      _
    $region23: #{bge_forward.1} parent=1 // pred_check_branch
      %46 = sbr.rel (0) target = $region25
    $region24: #{bge_forward.1} parent=1 // pred_region
      _
    $region25: #{bge_forward.1} parent=1 // pred_fallthru
      _
    // Predicated region
    $region26: #{bge_forward.1} parent=1 // pred_check
      _
    $region27: #{bge_forward.1} parent=1 // pred_check_branch
      %48 = sbr.rel (0) target = $region29
    $region28: #{bge_forward.1} parent=1 // pred_region
      _
    $region29: #{bge_forward.1} parent=1 // pred_fallthru
      _
    // Predicated region
    $region30: #{bge_forward.1} parent=1 // pred_check
      _
    $region31: #{bge_forward.1} parent=1 // pred_check_branch
      %50 = sbr.rel (0) target = $region33
    $region32: #{bge_forward.1} parent=1 // pred_region
      _
    $region33: #{bge_forward.1} parent=1 // pred_fallthru
      _
    // Predicated region
    $region34: #{bge_forward.1} parent=1 // pred_check
      _
    $region35: #{bge_forward.1} parent=1 // pred_check_branch
      %52 = sbr.rel (0) target = $region37
    $region36: #{bge_forward.1} parent=1 // pred_region
      _
    $region37: #{bge_forward.1} parent=1 // pred_fallthru
      _
    // Predicated region
    $region38: #{bge_forward.1} parent=1 // pred_check
      _
    $region39: #{bge_forward.1} parent=1 // pred_check_branch
      %54 = sbr.rel (0) target = $region41
    $region40: #{bge_forward.1} parent=1 // pred_region
      _
    $region41: #{bge_forward.1} parent=1 // pred_fallthru
      _
    // Predicated region
    $region42: #{bge_forward.1} parent=1 // pred_check
      _
    $region43: #{bge_forward.1} parent=1 // pred_check_branch
      %56 = sbr.rel (0) target = $region45
    $region44: #{bge_forward.1} parent=1 // pred_region
      %58 = vsyncadd [#allocation6], 0
      %s59 = sshll.u32 %s10, 4
      %s60 = int_to_ptr.hbm [resolvable:$true] %s59
      %s61 = sshll.u32 [#allocation5], 4
      %s62 = int_to_ptr.vmem [resolvable:$true] %s61
      %67 = dma.hbm_to_vmem [thread:$0]  %s60, 4096, %s62, [#allocation6], 128, 128, 8
    $region45: #{bge_forward.1} parent=1 // pred_fallthru
      _
    // Predicated region
    $region46: #{bge_forward.1} parent=1 // pred_check
      _
    $region47: #{bge_forward.1} parent=1 // pred_check_branch
      %69 = sbr.rel (0) target = $region49
    $region48: #{bge_forward.1} parent=1 // pred_region
      _
    $region49: #{bge_forward.1} parent=1 // pred_fallthru
      _
    // Predicated region
    $region50: #{bge_forward.1} parent=1 // pred_check
      _
    $region51: #{bge_forward.1} parent=1 // pred_check_branch
      %71 = sbr.rel (0) target = $region53
    $region52: #{bge_forward.1} parent=1 // pred_region
      %73 = vsyncadd [#allocation6], 0
      %s74 = sshll.u32 %s12, 4
      %s75 = int_to_ptr.hbm [resolvable:$true] %s74
      %s76 = sshll.u32 [#allocation7], 4
      %s77 = int_to_ptr.vmem [resolvable:$true] %s76
      %82 = dma.hbm_to_vmem [thread:$0]  %s75, 4096, %s77, [#allocation6], 128, 128, 8
    $region53: #{bge_forward.1} parent=1 // pred_fallthru
      _
    // Predicated region
    $region54: #{bge_forward.1} parent=1 // pred_check
      _
    $region55: #{bge_forward.1} parent=1 // pred_check_branch
      %84 = sbr.rel (0) target = $region57
    $region56: #{bge_forward.1} parent=1 // pred_region
      _
    $region57: #{bge_forward.1} parent=1 // pred_fallthru
      _
    // Predicated region
    $region58: #{bge_forward.1} parent=1 // pred_check
      _
    $region59: #{bge_forward.1} parent=1 // pred_check_branch
      %86 = sbr.rel (0) target = $region61
    $region60: #{bge_forward.1} parent=1 // pred_region
      _
    $region61: #{bge_forward.1} parent=1 // pred_fallthru
      _
    // Predicated region
    $region62: #{bge_forward.1} parent=1 // pred_check
      _
    $region63: #{bge_forward.1} parent=1 // pred_check_branch
      %88 = sbr.rel (0) target = $region65
    $region64: #{bge_forward.1} parent=1 // pred_region
      _
    $region65: #{bge_forward.1} parent=1 // pred_fallthru
      _
    // Predicated region
    $region66: #{bge_forward.1} parent=1 // pred_check
      _
    $region67: #{bge_forward.1} parent=1 // pred_check_branch
      %90 = sbr.rel (0) target = $region69
    $region68: #{bge_forward.1} parent=1 // pred_region
      %92 = dma.done [#allocation3], 12288
    $region69: #{bge_forward.1} parent=1 // pred_fallthru
      _
    // Predicated region
    $region70: #{bge_forward.1} parent=1 // pred_check
      _
    $region71: #{bge_forward.1} parent=1 // pred_check_branch
      %94 = sbr.rel (0) target = $region73
    $region72: #{bge_forward.1} parent=1 // pred_region
      %96 = dma.done [#allocation6], 4096
    $region73: #{bge_forward.1} parent=1 // pred_fallthru
      _
    // Predicated region
    $region74: #{bge_forward.1} parent=1 // pred_check
      _
    $region75: #{bge_forward.1} parent=1 // pred_check_branch
      %98 = sbr.rel (0) target = $region77
    $region76: #{bge_forward.1} parent=1 // pred_region
      %100 = dma.done [#allocation6], 4096
    $region77: #{bge_forward.1} parent=1 // pred_fallthru
      _
    %v101 = vlaneseq
    %v102 = vand.u32 %v101, 127
    %vm103 = vcmp.lt.s32.totalorder %v102, 32
    %v104 = vsel %vm103, 1, 0
    %v105 = vcvt.s32.f32 %v104
    %v106 = vld [vmem:[%s0] sm:$0xff]
    %v107 = vld [vmem:[%s2] sm:$0x1]
    %v108 = vld [vmem:[%s3] sm:$0x1]
    %109 = vadd.xlane.f32.xlu0 %v106
    %v110 = vpop.xlane.xlu0 %109
    %v111 = vmul.f32 %v110, 0.03125
    %v112 = vsub.f32 %v106, %v111
    %v113 = vmul.f32 %v112, %v105
    %v114 = vmul.f32 %v113, %v113
    %115 = vadd.xlane.f32.xlu0 %v114
    %v116 = vpop.xlane.xlu0 %115
    %v117 = vmul.f32 %v116, 0.03125
    %v118 = vadd.f32 %v117, 1e-12
    %v119 = vrsqrt.pop %v118
    %v120 = vmul.f32 %v119, %v118
    %v121 = vmul.f32 %v120, %v119
    %v122 = vmul.f32 0.5, %v121
    %v123 = vsub.f32 1.5, %v122
    %v124 = vmul.f32 %v119, %v123
    %vm125 = vweird.f32 %v118
    %vm126 = vweird.f32 %v119
    %vm127 = vmor %vm125, %vm126
    %v128 = vsel %vm127, %v119, %v124
    %v129 = vmul.f32 %v113, %v128
    %v131 = vperm.slane %v107, 0
    %v133 = vmul.f32 %v129, %v131
    %v135 = vperm.slane %v108, 0
    %v137 = vadd.f32 %v133, %v135
    %v138 = vld [vmem:[%s1] sm:$0x1]
    %v140 = vperm.slane %v138, 0
    %v142 = vld [vmem:[#allocation2] sm:$0xff]
    %v143 = vld [vmem:[#allocation2 + $0x8] sm:$0xff]
    %v144 = vld [vmem:[#allocation2 + $0x10] sm:$0xff]
    %v145 = vld [vmem:[#allocation2 + $0x18] sm:$0xff]
    %v146 = vld [vmem:[#allocation2 + $0x20] sm:$0xff]
    %v147 = vld [vmem:[#allocation2 + $0x28] sm:$0xff]
    %v148 = vld [vmem:[#allocation2 + $0x30] sm:$0xff]
    %v149 = vld [vmem:[#allocation2 + $0x38] sm:$0xff]
    %v150 = vld [vmem:[#allocation2 + $0x40] sm:$0xff]
    %v151 = vld [vmem:[#allocation2 + $0x48] sm:$0xff]
    %v152 = vld [vmem:[#allocation2 + $0x50] sm:$0xff]
    %v153 = vld [vmem:[#allocation2 + $0x58] sm:$0xff]
    %v154 = vld [vmem:[#allocation2 + $0x60] sm:$0xff]
    %v155 = vld [vmem:[#allocation2 + $0x68] sm:$0xff]
    %v156 = vld [vmem:[#allocation2 + $0x70] sm:$0xff]
    %v157 = vld [vmem:[#allocation2 + $0x78] sm:$0xff]
    %v158 = vld [vmem:[#allocation2 + $0x80] sm:$0xff]
    %v159 = vld [vmem:[#allocation2 + $0x88] sm:$0xff]
    %v160 = vld [vmem:[#allocation2 + $0x90] sm:$0xff]
    %v161 = vld [vmem:[#allocation2 + $0x98] sm:$0xff]
    %v162 = vld [vmem:[#allocation2 + $0xa0] sm:$0xff]
    %v163 = vld [vmem:[#allocation2 + $0xa8] sm:$0xff]
    %v164 = vld [vmem:[#allocation2 + $0xb0] sm:$0xff]
    %v165 = vld [vmem:[#allocation2 + $0xb8] sm:$0xff]
    %v166 = vld [vmem:[#allocation2 + $0xc0] sm:$0xff]
    %v167 = vld [vmem:[#allocation2 + $0xc8] sm:$0xff]
    %v168 = vld [vmem:[#allocation2 + $0xd0] sm:$0xff]
    %v169 = vld [vmem:[#allocation2 + $0xd8] sm:$0xff]
    %v170 = vld [vmem:[#allocation2 + $0xe0] sm:$0xff]
    %v171 = vld [vmem:[#allocation2 + $0xe8] sm:$0xff]
    %v172 = vld [vmem:[#allocation2 + $0xf0] sm:$0xff]
    %v173 = vld [vmem:[#allocation2 + $0xf8] sm:$0xff]
    %v174 = vld [vmem:[#allocation2 + $0x100] sm:$0xff]
    %v175 = vld [vmem:[#allocation2 + $0x108] sm:$0xff]
    %v176 = vld [vmem:[#allocation2 + $0x110] sm:$0xff]
    %v177 = vld [vmem:[#allocation2 + $0x118] sm:$0xff]
    %v178 = vld [vmem:[#allocation2 + $0x120] sm:$0xff]
    %v179 = vld [vmem:[#allocation2 + $0x128] sm:$0xff]
    %v180 = vld [vmem:[#allocation2 + $0x130] sm:$0xff]
    %v181 = vld [vmem:[#allocation2 + $0x138] sm:$0xff]
    %v182 = vld [vmem:[#allocation2 + $0x140] sm:$0xff]
    %v183 = vld [vmem:[#allocation2 + $0x148] sm:$0xff]
    %v184 = vld [vmem:[#allocation2 + $0x150] sm:$0xff]
    %v185 = vld [vmem:[#allocation2 + $0x158] sm:$0xff]
    %v186 = vld [vmem:[#allocation2 + $0x160] sm:$0xff]
    %v187 = vld [vmem:[#allocation2 + $0x168] sm:$0xff]
    %v188 = vld [vmem:[#allocation2 + $0x170] sm:$0xff]
    %v189 = vld [vmem:[#allocation2 + $0x178] sm:$0xff]
    %v190 = vld [vmem:[%s5] sm:$0x7]
    %v192 = vperm.slane %v190, 0
    %v193 = vperm.slane %v190, 1
    %v194 = vperm.slane %v190, 2
    %198 = vmatpush.msra.mxu0 %v187
    %199 = vmatpush.msra.mxu0 %v184
    %200 = vmatpush.msra.mxu0 %v181
    %201 = vmatpush.msra.mxu0 %v178
    %202 = vmatpush.msra.mxu0 %v175
    %203 = vmatpush.msra.mxu0 %v172
    %204 = vmatpush.msra.mxu0 %v169
    %205 = vmatpush.msra.mxu0 %v166
    %206 = vmatpush.msra.mxu0 %v163
    %207 = vmatpush.msra.mxu0 %v160
    %208 = vmatpush.msra.mxu0 %v157
    %209 = vmatpush.msra.mxu0 %v154
    %210 = vmatpush.msra.mxu0 %v151
    %211 = vmatpush.msra.mxu0 %v148
    %212 = vmatpush.msra.mxu0 %v145
    %213 = vmatpush.msra.mxu0 %v142
    %214 = vmatmul.f32.gmra.mxu0 %v137
    %v215 = vpop.f32.mrf.mxu0
    %v216 = vadd.f32 %v192, %v215
    %217 = vdwg.mxu0
    %218 = vmatpush.msra.mxu0 %v188
    %219 = vmatpush.msra.mxu0 %v185
    %220 = vmatpush.msra.mxu0 %v182
    %221 = vmatpush.msra.mxu0 %v179
    %222 = vmatpush.msra.mxu0 %v176
    %223 = vmatpush.msra.mxu0 %v173
    %224 = vmatpush.msra.mxu0 %v170
    %225 = vmatpush.msra.mxu0 %v167
    %226 = vmatpush.msra.mxu0 %v164
    %227 = vmatpush.msra.mxu0 %v161
    %228 = vmatpush.msra.mxu0 %v158
    %229 = vmatpush.msra.mxu0 %v155
    %230 = vmatpush.msra.mxu0 %v152
    %231 = vmatpush.msra.mxu0 %v149
    %232 = vmatpush.msra.mxu0 %v146
    %233 = vmatpush.msra.mxu0 %v143
    %234 = vmatmul.f32.gmra.mxu0 %v137
    %v235 = vpop.f32.mrf.mxu0
    %v236 = vadd.f32 %v193, %v235
    %237 = vdwg.mxu0
    %238 = vmatpush.msra.mxu0 %v189
    %239 = vmatpush.msra.mxu0 %v186
    %240 = vmatpush.msra.mxu0 %v183
    %241 = vmatpush.msra.mxu0 %v180
    %242 = vmatpush.msra.mxu0 %v177
    %243 = vmatpush.msra.mxu0 %v174
    %244 = vmatpush.msra.mxu0 %v171
    %245 = vmatpush.msra.mxu0 %v168
    %246 = vmatpush.msra.mxu0 %v165
    %247 = vmatpush.msra.mxu0 %v162
    %248 = vmatpush.msra.mxu0 %v159
    %249 = vmatpush.msra.mxu0 %v156
    %250 = vmatpush.msra.mxu0 %v153
    %251 = vmatpush.msra.mxu0 %v150
    %252 = vmatpush.msra.mxu0 %v147
    %253 = vmatpush.msra.mxu0 %v144
    %254 = vmatmul.f32.gmra.mxu0 %v137
    %v255 = vpop.f32.mrf.mxu0
    %v256 = vadd.f32 %v194, %v255
    %257 = vdwg.mxu0
    %vm258 = vcmask 64512
    %v260 = vsel %vm258, %v216, 0
    %v263 = vsel %vm258, %v236, 0
    %265 = vmatpush.xpose.msra.mxu0 0.0
    %266 = vmatpush.xpose.msra.mxu0 0.0
    %267 = vmatpush.xpose.msra.mxu0 0.0
    %268 = vmatpush.xpose.msra.mxu0 0.0
    %269 = vmatpush.xpose.msra.mxu0 0.0
    %270 = vmatpush.xpose.msra.mxu0 0.0
    %271 = vmatpush.xpose.msra.mxu0 0.0
    %272 = vmatpush.xpose.msra.mxu0 0.0
    %273 = vmatpush.xpose.msra.mxu0 0.0
    %274 = vmatpush.xpose.msra.mxu0 0.0
    %275 = vmatpush.xpose.msra.mxu0 0.0
    %276 = vmatpush.xpose.msra.mxu0 0.0
    %277 = vmatpush.xpose.msra.mxu0 0.0
    %278 = vmatpush.xpose.msra.mxu0 0.0
    %279 = vmatpush.xpose.msra.mxu0 0.0
    %280 = vmatpush.xpose.msra.mxu0 %v263
    %281 = vmatmul.f32.gmra.mxu0 %v260
    %v282 = vpop.f32.mrf.mxu0
    %v283 = vadd.f32 0.0, %v282
    %284 = vdwg.mxu0
    %v285 = vmul.f32 %v283, 0.35355338
    %v286 = vadd.f32 %v285, %v140
    %v287 = vsel %vm258, %v286, -inf
    %288 = vmax.xlane.f32.xlu0 %v287
    %v289 = vpop.xlane.xlu0 %288
    %v290 = vsub.f32 %v286, %v289
    %v291 = vmul.f32 %v290, 1.442695
    %v292 = vpow.pop %v291
    %v293 = vsel %vm258, %v292, 0.0
    %294 = vadd.xlane.f32.xlu0 %v293
    %v295 = vpop.xlane.xlu0 %294
    %v296 = vrcp.pop %v295
    %v297 = vmul.f32 %v292, %v296
    %v299 = vsel %vm258, %v297, 0
    %301 = vmatpush.msra.mxu0 0.0
    %302 = vmatpush.msra.mxu0 0.0
    %303 = vmatpush.msra.mxu0 0.0
    %304 = vmatpush.msra.mxu0 0.0
    %305 = vmatpush.msra.mxu0 0.0
    %306 = vmatpush.msra.mxu0 0.0
    %307 = vmatpush.msra.mxu0 0.0
    %308 = vmatpush.msra.mxu0 0.0
    %309 = vmatpush.msra.mxu0 0.0
    %310 = vmatpush.msra.mxu0 0.0
    %311 = vmatpush.msra.mxu0 0.0
    %312 = vmatpush.msra.mxu0 0.0
    %313 = vmatpush.msra.mxu0 0.0
    %314 = vmatpush.msra.mxu0 0.0
    %315 = vmatpush.msra.mxu0 0.0
    %316 = vmatpush.msra.mxu0 %v256
    %317 = vmatmul.f32.gmra.mxu0 %v299
    %v318 = vpop.f32.mrf.mxu0
    %v319 = vadd.f32 0.0, %v318
    %320 = vdwg.mxu0
    %321 = vrot.lane.b32.xlu0 %v216, 120
    %v322 = vpop.permute.xlu0 %321
    %323 = vrot.lane.b32.xlu0 %v236, 120
    %v324 = vpop.permute.xlu0 %323
    %v325 = vsel %vm258, %v322, 0
    %v327 = vsel %vm258, %v324, 0
    %329 = vmatpush.xpose.msra.mxu0 0.0
    %330 = vmatpush.xpose.msra.mxu0 0.0
    %331 = vmatpush.xpose.msra.mxu0 0.0
    %332 = vmatpush.xpose.msra.mxu0 0.0
    %333 = vmatpush.xpose.msra.mxu0 0.0
    %334 = vmatpush.xpose.msra.mxu0 0.0
    %335 = vmatpush.xpose.msra.mxu0 0.0
    %336 = vmatpush.xpose.msra.mxu0 0.0
    %337 = vmatpush.xpose.msra.mxu0 0.0
    %338 = vmatpush.xpose.msra.mxu0 0.0
    %339 = vmatpush.xpose.msra.mxu0 0.0
    %340 = vmatpush.xpose.msra.mxu0 0.0
    %341 = vmatpush.xpose.msra.mxu0 0.0
    %342 = vmatpush.xpose.msra.mxu0 0.0
    %343 = vmatpush.xpose.msra.mxu0 0.0
    %344 = vmatpush.xpose.msra.mxu0 %v327
    %345 = vmatmul.f32.gmra.mxu0 %v325
    %v346 = vpop.f32.mrf.mxu0
    %v347 = vadd.f32 0.0, %v346
    %348 = vdwg.mxu0
    %v349 = vmul.f32 %v347, 0.35355338
    %v350 = vadd.f32 %v349, %v140
    %v351 = vsel %vm258, %v350, -inf
    %352 = vmax.xlane.f32.xlu0 %v351
    %v353 = vpop.xlane.xlu0 %352
    %v354 = vsub.f32 %v350, %v353
    %v355 = vmul.f32 %v354, 1.442695
    %v356 = vpow.pop %v355
    %v357 = vsel %vm258, %v356, 0.0
    %358 = vadd.xlane.f32.xlu0 %v357
    %v359 = vpop.xlane.xlu0 %358
    %v360 = vrcp.pop %v359
    %v361 = vmul.f32 %v356, %v360
    %363 = vrot.lane.b32.xlu0 %v256, 120
    %v364 = vpop.permute.xlu0 %363
    %v367 = vsel %vm258, %v361, 0
    %369 = vmatpush.msra.mxu0 0.0
    %370 = vmatpush.msra.mxu0 0.0
    %371 = vmatpush.msra.mxu0 0.0
    %372 = vmatpush.msra.mxu0 0.0
    %373 = vmatpush.msra.mxu0 0.0
    %374 = vmatpush.msra.mxu0 0.0
    %375 = vmatpush.msra.mxu0 0.0
    %376 = vmatpush.msra.mxu0 0.0
    %377 = vmatpush.msra.mxu0 0.0
    %378 = vmatpush.msra.mxu0 0.0
    %379 = vmatpush.msra.mxu0 0.0
    %380 = vmatpush.msra.mxu0 0.0
    %381 = vmatpush.msra.mxu0 0.0
    %382 = vmatpush.msra.mxu0 0.0
    %383 = vmatpush.msra.mxu0 0.0
    %384 = vmatpush.msra.mxu0 %v364
    %385 = vmatmul.f32.gmra.mxu0 %v367
    %v386 = vpop.f32.mrf.mxu0
    %v387 = vadd.f32 0.0, %v386
    %388 = vdwg.mxu0
    %389 = vrot.lane.b32.xlu0 %v216, 112
    %v390 = vpop.permute.xlu0 %389
    %391 = vrot.lane.b32.xlu0 %v236, 112
    %v392 = vpop.permute.xlu0 %391
    %v393 = vsel %vm258, %v390, 0
    %v395 = vsel %vm258, %v392, 0
    %397 = vmatpush.xpose.msra.mxu0 0.0
    %398 = vmatpush.xpose.msra.mxu0 0.0
    %399 = vmatpush.xpose.msra.mxu0 0.0
    %400 = vmatpush.xpose.msra.mxu0 0.0
    %401 = vmatpush.xpose.msra.mxu0 0.0
    %402 = vmatpush.xpose.msra.mxu0 0.0
    %403 = vmatpush.xpose.msra.mxu0 0.0
    %404 = vmatpush.xpose.msra.mxu0 0.0
    %405 = vmatpush.xpose.msra.mxu0 0.0
    %406 = vmatpush.xpose.msra.mxu0 0.0
    %407 = vmatpush.xpose.msra.mxu0 0.0
    %408 = vmatpush.xpose.msra.mxu0 0.0
    %409 = vmatpush.xpose.msra.mxu0 0.0
    %410 = vmatpush.xpose.msra.mxu0 0.0
    %411 = vmatpush.xpose.msra.mxu0 0.0
    %412 = vmatpush.xpose.msra.mxu0 %v395
    %413 = vmatmul.f32.gmra.mxu0 %v393
    %v414 = vpop.f32.mrf.mxu0
    %v415 = vadd.f32 0.0, %v414
    %416 = vdwg.mxu0
    %v417 = vmul.f32 %v415, 0.35355338
    %v418 = vadd.f32 %v417, %v140
    %v419 = vsel %vm258, %v418, -inf
    %420 = vmax.xlane.f32.xlu0 %v419
    %v421 = vpop.xlane.xlu0 %420
    %v422 = vsub.f32 %v418, %v421
    %v423 = vmul.f32 %v422, 1.442695
    %v424 = vpow.pop %v423
    %v425 = vsel %vm258, %v424, 0.0
    %426 = vadd.xlane.f32.xlu0 %v425
    %v427 = vpop.xlane.xlu0 %426
    %v428 = vrcp.pop %v427
    %v429 = vmul.f32 %v424, %v428
    %430 = vrot.lane.b32.xlu0 %v256, 112
    %v431 = vpop.permute.xlu0 %430
    %v434 = vsel %vm258, %v429, 0
    %436 = vmatpush.msra.mxu0 0.0
    %437 = vmatpush.msra.mxu0 0.0
    %438 = vmatpush.msra.mxu0 0.0
    %439 = vmatpush.msra.mxu0 0.0
    %440 = vmatpush.msra.mxu0 0.0
    %441 = vmatpush.msra.mxu0 0.0
    %442 = vmatpush.msra.mxu0 0.0
    %443 = vmatpush.msra.mxu0 0.0
    %444 = vmatpush.msra.mxu0 0.0
    %445 = vmatpush.msra.mxu0 0.0
    %446 = vmatpush.msra.mxu0 0.0
    %447 = vmatpush.msra.mxu0 0.0
    %448 = vmatpush.msra.mxu0 0.0
    %449 = vmatpush.msra.mxu0 0.0
    %450 = vmatpush.msra.mxu0 0.0
    %451 = vmatpush.msra.mxu0 %v431
    %452 = vmatmul.f32.gmra.mxu0 %v434
    %v453 = vpop.f32.mrf.mxu0
    %v454 = vadd.f32 0.0, %v453
    %455 = vdwg.mxu0
    %456 = vrot.lane.b32.xlu0 %v216, 104
    %v457 = vpop.permute.xlu0 %456
    %458 = vrot.lane.b32.xlu0 %v236, 104
    %v459 = vpop.permute.xlu0 %458
    %v460 = vsel %vm258, %v457, 0
    %v462 = vsel %vm258, %v459, 0
    %464 = vmatpush.xpose.msra.mxu0 0.0
    %465 = vmatpush.xpose.msra.mxu0 0.0
    %466 = vmatpush.xpose.msra.mxu0 0.0
    %467 = vmatpush.xpose.msra.mxu0 0.0
    %468 = vmatpush.xpose.msra.mxu0 0.0
    %469 = vmatpush.xpose.msra.mxu0 0.0
    %470 = vmatpush.xpose.msra.mxu0 0.0
    %471 = vmatpush.xpose.msra.mxu0 0.0
    %472 = vmatpush.xpose.msra.mxu0 0.0
    %473 = vmatpush.xpose.msra.mxu0 0.0
    %474 = vmatpush.xpose.msra.mxu0 0.0
    %475 = vmatpush.xpose.msra.mxu0 0.0
    %476 = vmatpush.xpose.msra.mxu0 0.0
    %477 = vmatpush.xpose.msra.mxu0 0.0
    %478 = vmatpush.xpose.msra.mxu0 0.0
    %479 = vmatpush.xpose.msra.mxu0 %v462
    %480 = vmatmul.f32.gmra.mxu0 %v460
    %v481 = vpop.f32.mrf.mxu0
    %v482 = vadd.f32 0.0, %v481
    %483 = vdwg.mxu0
    %v484 = vmul.f32 %v482, 0.35355338
    %v485 = vadd.f32 %v484, %v140
    %v486 = vsel %vm258, %v485, -inf
    %487 = vmax.xlane.f32.xlu0 %v486
    %v488 = vpop.xlane.xlu0 %487
    %v489 = vsub.f32 %v485, %v488
    %v490 = vmul.f32 %v489, 1.442695
    %v491 = vpow.pop %v490
    %v492 = vsel %vm258, %v491, 0.0
    %493 = vadd.xlane.f32.xlu0 %v492
    %v494 = vpop.xlane.xlu0 %493
    %v495 = vrcp.pop %v494
    %v496 = vmul.f32 %v491, %v495
    %497 = vrot.lane.b32.xlu0 %v256, 104
    %v498 = vpop.permute.xlu0 %497
    %v501 = vsel %vm258, %v496, 0
    %503 = vmatpush.msra.mxu0 0.0
    %504 = vmatpush.msra.mxu0 0.0
    %505 = vmatpush.msra.mxu0 0.0
    %506 = vmatpush.msra.mxu0 0.0
    %507 = vmatpush.msra.mxu0 0.0
    %508 = vmatpush.msra.mxu0 0.0
    %509 = vmatpush.msra.mxu0 0.0
    %510 = vmatpush.msra.mxu0 0.0
    %511 = vmatpush.msra.mxu0 0.0
    %512 = vmatpush.msra.mxu0 0.0
    %513 = vmatpush.msra.mxu0 0.0
    %514 = vmatpush.msra.mxu0 0.0
    %515 = vmatpush.msra.mxu0 0.0
    %516 = vmatpush.msra.mxu0 0.0
    %517 = vmatpush.msra.mxu0 0.0
    %518 = vmatpush.msra.mxu0 %v498
    %519 = vmatmul.f32.gmra.mxu0 %v501
    %v520 = vpop.f32.mrf.mxu0
    %v521 = vadd.f32 0.0, %v520
    %522 = vdwg.mxu0
    %524 = vrot.lane.b32.xlu0 %v387, 8
    %v525 = vpop.permute.xlu0 %524
    %528 = vrot.lane.b32.xlu0 %v454, 16
    %v529 = vpop.permute.xlu0 %528
    %532 = vrot.lane.b32.xlu0 %v521, 24
    %v533 = vpop.permute.xlu0 %532
    %v535 = vsel %vm258, %v319, %v525
    %vm536 = vcmask 130048
    %v537 = vsel %vm536, %v535, %v529
    %vm538 = vcmask 195584
    %v539 = vsel %vm538, %v537, %v533
    %v540 = vld [vmem:[%s6] sm:$0xff]
    %v541 = vld [vmem:[%s6 + $0x8] sm:$0xff]
    %v542 = vld [vmem:[%s6 + $0x10] sm:$0xff]
    %v543 = vld [vmem:[%s6 + $0x18] sm:$0xff]
    %v544 = vld [vmem:[%s7] sm:$0x1]
    %v546 = vperm.slane %v544, 0
    %vm548 = vcmask 261120
    %v550 = vsel %vm548, %v539, 0
    %552 = vmatpush.msra.mxu0 0.0
    %553 = vmatpush.msra.mxu0 0.0
    %554 = vmatpush.msra.mxu0 0.0
    %555 = vmatpush.msra.mxu0 0.0
    %556 = vmatpush.msra.mxu0 0.0
    %557 = vmatpush.msra.mxu0 0.0
    %558 = vmatpush.msra.mxu0 0.0
    %559 = vmatpush.msra.mxu0 0.0
    %560 = vmatpush.msra.mxu0 0.0
    %561 = vmatpush.msra.mxu0 0.0
    %562 = vmatpush.msra.mxu0 0.0
    %563 = vmatpush.msra.mxu0 0.0
    %564 = vmatpush.msra.mxu0 %v543
    %565 = vmatpush.msra.mxu0 %v542
    %566 = vmatpush.msra.mxu0 %v541
    %567 = vmatpush.msra.mxu0 %v540
    %568 = vmatmul.f32.gmra.mxu0 %v550
    %v569 = vpop.f32.mrf.mxu0
    %v570 = vadd.f32 %v546, %v569
    %571 = vdwg.mxu0
    %v572 = vadd.f32 %v137, %v570
    %v573 = vld [vmem:[%s8] sm:$0x1]
    %v574 = vld [vmem:[%s9] sm:$0x1]
    %575 = vadd.xlane.f32.xlu0 %v572
    %v576 = vpop.xlane.xlu0 %575
    %v577 = vmul.f32 %v576, 0.03125
    %v578 = vsub.f32 %v572, %v577
    %v579 = vmul.f32 %v578, %v105
    %v580 = vmul.f32 %v579, %v579
    %581 = vadd.xlane.f32.xlu0 %v580
    %v582 = vpop.xlane.xlu0 %581
    %v583 = vmul.f32 %v582, 0.03125
    %v584 = vadd.f32 %v583, 1e-12
    %v585 = vrsqrt.pop %v584
    %v586 = vmul.f32 %v585, %v584
    %v587 = vmul.f32 %v586, %v585
    %v588 = vmul.f32 0.5, %v587
    %v589 = vsub.f32 1.5, %v588
    %v590 = vmul.f32 %v585, %v589
    %vm591 = vweird.f32 %v584
    %vm592 = vweird.f32 %v585
    %vm593 = vmor %vm591, %vm592
    %v594 = vsel %vm593, %v585, %v590
    %v595 = vmul.f32 %v579, %v594
    %v597 = vperm.slane %v573, 0
    %v599 = vmul.f32 %v595, %v597
    %v601 = vperm.slane %v574, 0
    %v603 = vadd.f32 %v599, %v601
    %v604 = vld [vmem:[#allocation5] sm:$0xff]
    %v605 = vld [vmem:[#allocation5 + $0x8] sm:$0xff]
    %v606 = vld [vmem:[#allocation5 + $0x10] sm:$0xff]
    %v607 = vld [vmem:[#allocation5 + $0x18] sm:$0xff]
    %v608 = vld [vmem:[#allocation5 + $0x20] sm:$0xff]
    %v609 = vld [vmem:[#allocation5 + $0x28] sm:$0xff]
    %v610 = vld [vmem:[#allocation5 + $0x30] sm:$0xff]
    %v611 = vld [vmem:[#allocation5 + $0x38] sm:$0xff]
    %v612 = vld [vmem:[#allocation5 + $0x40] sm:$0xff]
    %v613 = vld [vmem:[#allocation5 + $0x48] sm:$0xff]
    %v614 = vld [vmem:[#allocation5 + $0x50] sm:$0xff]
    %v615 = vld [vmem:[#allocation5 + $0x58] sm:$0xff]
    %v616 = vld [vmem:[#allocation5 + $0x60] sm:$0xff]
    %v617 = vld [vmem:[#allocation5 + $0x68] sm:$0xff]
    %v618 = vld [vmem:[#allocation5 + $0x70] sm:$0xff]
    %v619 = vld [vmem:[#allocation5 + $0x78] sm:$0xff]
    %v620 = vld [vmem:[%s11] sm:$0x1]
    %v622 = vperm.slane %v620, 0
    %624 = vmatpush.msra.mxu0 %v619
    %625 = vmatpush.msra.mxu0 %v618
    %626 = vmatpush.msra.mxu0 %v617
    %627 = vmatpush.msra.mxu0 %v616
    %628 = vmatpush.msra.mxu0 %v615
    %629 = vmatpush.msra.mxu0 %v614
    %630 = vmatpush.msra.mxu0 %v613
    %631 = vmatpush.msra.mxu0 %v612
    %632 = vmatpush.msra.mxu0 %v611
    %633 = vmatpush.msra.mxu0 %v610
    %634 = vmatpush.msra.mxu0 %v609
    %635 = vmatpush.msra.mxu0 %v608
    %636 = vmatpush.msra.mxu0 %v607
    %637 = vmatpush.msra.mxu0 %v606
    %638 = vmatpush.msra.mxu0 %v605
    %639 = vmatpush.msra.mxu0 %v604
    %640 = vmatmul.f32.gmra.mxu0 %v603
    %v641 = vpop.f32.mrf.mxu0
    %v642 = vadd.f32 %v622, %v641
    %643 = vdwg.mxu0
    %v644 = vmul.f32 %v642, 0.5
    %v645 = vmul.f32 %v642, 0.044715
    %v646 = vmul.f32 %v645, %v642
    %v647 = vmul.f32 %v646, %v642
    %v648 = vadd.f32 %v642, %v647
    %v649 = vmul.f32 %v648, 0.7978846
    %v650 = vtanh.pop %v649
    %v651 = vadd.f32 %v650, 1.0
    %v652 = vmul.f32 %v644, %v651
    %v653 = vld [vmem:[#allocation7] sm:$0xff]
    %v654 = vld [vmem:[#allocation7 + $0x8] sm:$0xff]
    %v655 = vld [vmem:[#allocation7 + $0x10] sm:$0xff]
    %v656 = vld [vmem:[#allocation7 + $0x18] sm:$0xff]
    %v657 = vld [vmem:[#allocation7 + $0x20] sm:$0xff]
    %v658 = vld [vmem:[#allocation7 + $0x28] sm:$0xff]
    %v659 = vld [vmem:[#allocation7 + $0x30] sm:$0xff]
    %v660 = vld [vmem:[#allocation7 + $0x38] sm:$0xff]
    %v661 = vld [vmem:[#allocation7 + $0x40] sm:$0xff]
    %v662 = vld [vmem:[#allocation7 + $0x48] sm:$0xff]
    %v663 = vld [vmem:[#allocation7 + $0x50] sm:$0xff]
    %v664 = vld [vmem:[#allocation7 + $0x58] sm:$0xff]
    %v665 = vld [vmem:[#allocation7 + $0x60] sm:$0xff]
    %v666 = vld [vmem:[#allocation7 + $0x68] sm:$0xff]
    %v667 = vld [vmem:[#allocation7 + $0x70] sm:$0xff]
    %v668 = vld [vmem:[#allocation7 + $0x78] sm:$0xff]
    %v669 = vld [vmem:[%s13] sm:$0x1]
    %v671 = vperm.slane %v669, 0
    %673 = vmatpush.msra.mxu0 %v668
    %674 = vmatpush.msra.mxu0 %v667
    %675 = vmatpush.msra.mxu0 %v666
    %676 = vmatpush.msra.mxu0 %v665
    %677 = vmatpush.msra.mxu0 %v664
    %678 = vmatpush.msra.mxu0 %v663
    %679 = vmatpush.msra.mxu0 %v662
    %680 = vmatpush.msra.mxu0 %v661
    %681 = vmatpush.msra.mxu0 %v660
    %682 = vmatpush.msra.mxu0 %v659
    %683 = vmatpush.msra.mxu0 %v658
    %684 = vmatpush.msra.mxu0 %v657
    %685 = vmatpush.msra.mxu0 %v656
    %686 = vmatpush.msra.mxu0 %v655
    %687 = vmatpush.msra.mxu0 %v654
    %688 = vmatpush.msra.mxu0 %v653
    %689 = vmatmul.f32.gmra.mxu0 %v652
    %v690 = vpop.f32.mrf.mxu0
    %v691 = vadd.f32 %v671, %v690
    %692 = vdwg.mxu0
    %v693 = vadd.f32 %v603, %v691
    %v694 = vld [vmem:[%s14] sm:$0x1]
    %v695 = vld [vmem:[%s15] sm:$0x1]
    %696 = vadd.xlane.f32.xlu0 %v693
    %v697 = vpop.xlane.xlu0 %696
    %v698 = vmul.f32 %v697, 0.03125
    %v699 = vsub.f32 %v693, %v698
    %v700 = vmul.f32 %v699, %v105
    %v701 = vmul.f32 %v700, %v700
    %702 = vadd.xlane.f32.xlu0 %v701
    %v703 = vpop.xlane.xlu0 %702
    %v704 = vmul.f32 %v703, 0.03125
    %v705 = vadd.f32 %v704, 1e-12
    %v706 = vrsqrt.pop %v705
    %v707 = vmul.f32 %v706, %v705
    %v708 = vmul.f32 %v707, %v706
    %v709 = vmul.f32 0.5, %v708
    %v710 = vsub.f32 1.5, %v709
    %v711 = vmul.f32 %v706, %v710
    %vm712 = vweird.f32 %v705
    %vm713 = vweird.f32 %v706
    %vm714 = vmor %vm712, %vm713
    %v715 = vsel %vm714, %v706, %v711
    %v716 = vmul.f32 %v700, %v715
    %v718 = vperm.slane %v694, 0
    %v720 = vmul.f32 %v716, %v718
    %v722 = vperm.slane %v695, 0
    %v724 = vadd.f32 %v720, %v722
    %s725 = scalar_lea.vmem [#allocation2], 384
    %v726 = vld [vmem:[%s725] sm:$0xff]
    %v727 = vld [vmem:[%s725 + $0x8] sm:$0xff]
    %v728 = vld [vmem:[%s725 + $0x10] sm:$0xff]
    %v729 = vld [vmem:[%s725 + $0x18] sm:$0xff]
    %v730 = vld [vmem:[%s725 + $0x20] sm:$0xff]
    %v731 = vld [vmem:[%s725 + $0x28] sm:$0xff]
    %v732 = vld [vmem:[%s725 + $0x30] sm:$0xff]
    %v733 = vld [vmem:[%s725 + $0x38] sm:$0xff]
    %v734 = vld [vmem:[%s725 + $0x40] sm:$0xff]
    %v735 = vld [vmem:[%s725 + $0x48] sm:$0xff]
    %v736 = vld [vmem:[%s725 + $0x50] sm:$0xff]
    %v737 = vld [vmem:[%s725 + $0x58] sm:$0xff]
    %v738 = vld [vmem:[%s725 + $0x60] sm:$0xff]
    %v739 = vld [vmem:[%s725 + $0x68] sm:$0xff]
    %v740 = vld [vmem:[%s725 + $0x70] sm:$0xff]
    %v741 = vld [vmem:[%s725 + $0x78] sm:$0xff]
    %v742 = vld [vmem:[%s725 + $0x80] sm:$0xff]
    %v743 = vld [vmem:[%s725 + $0x88] sm:$0xff]
    %v744 = vld [vmem:[%s725 + $0x90] sm:$0xff]
    %v745 = vld [vmem:[%s725 + $0x98] sm:$0xff]
    %v746 = vld [vmem:[%s725 + $0xa0] sm:$0xff]
    %v747 = vld [vmem:[%s725 + $0xa8] sm:$0xff]
    %v748 = vld [vmem:[%s725 + $0xb0] sm:$0xff]
    %v749 = vld [vmem:[%s725 + $0xb8] sm:$0xff]
    %v750 = vld [vmem:[%s725 + $0xc0] sm:$0xff]
    %v751 = vld [vmem:[%s725 + $0xc8] sm:$0xff]
    %v752 = vld [vmem:[%s725 + $0xd0] sm:$0xff]
    %v753 = vld [vmem:[%s725 + $0xd8] sm:$0xff]
    %v754 = vld [vmem:[%s725 + $0xe0] sm:$0xff]
    %v755 = vld [vmem:[%s725 + $0xe8] sm:$0xff]
    %v756 = vld [vmem:[%s725 + $0xf0] sm:$0xff]
    %v757 = vld [vmem:[%s725 + $0xf8] sm:$0xff]
    %v758 = vld [vmem:[%s725 + $0x100] sm:$0xff]
    %v759 = vld [vmem:[%s725 + $0x108] sm:$0xff]
    %v760 = vld [vmem:[%s725 + $0x110] sm:$0xff]
    %v761 = vld [vmem:[%s725 + $0x118] sm:$0xff]
    %v762 = vld [vmem:[%s725 + $0x120] sm:$0xff]
    %v763 = vld [vmem:[%s725 + $0x128] sm:$0xff]
    %v764 = vld [vmem:[%s725 + $0x130] sm:$0xff]
    %v765 = vld [vmem:[%s725 + $0x138] sm:$0xff]
    %v766 = vld [vmem:[%s725 + $0x140] sm:$0xff]
    %v767 = vld [vmem:[%s725 + $0x148] sm:$0xff]
    %v768 = vld [vmem:[%s725 + $0x150] sm:$0xff]
    %v769 = vld [vmem:[%s725 + $0x158] sm:$0xff]
    %v770 = vld [vmem:[%s725 + $0x160] sm:$0xff]
    %v771 = vld [vmem:[%s725 + $0x168] sm:$0xff]
    %v772 = vld [vmem:[%s725 + $0x170] sm:$0xff]
    %v773 = vld [vmem:[%s725 + $0x178] sm:$0xff]
    %s774 = scalar_lea.vmem %s5, 3
    %v775 = vld [vmem:[%s774] sm:$0x7]
    %v777 = vperm.slane %v775, 0
    %v778 = vperm.slane %v775, 1
    %v779 = vperm.slane %v775, 2
    %783 = vmatpush.msra.mxu0 %v771
    %784 = vmatpush.msra.mxu0 %v768
    %785 = vmatpush.msra.mxu0 %v765
    %786 = vmatpush.msra.mxu0 %v762
    %787 = vmatpush.msra.mxu0 %v759
    %788 = vmatpush.msra.mxu0 %v756
    %789 = vmatpush.msra.mxu0 %v753
    %790 = vmatpush.msra.mxu0 %v750
    %791 = vmatpush.msra.mxu0 %v747
    %792 = vmatpush.msra.mxu0 %v744
    %793 = vmatpush.msra.mxu0 %v741
    %794 = vmatpush.msra.mxu0 %v738
    %795 = vmatpush.msra.mxu0 %v735
    %796 = vmatpush.msra.mxu0 %v732
    %797 = vmatpush.msra.mxu0 %v729
    %798 = vmatpush.msra.mxu0 %v726
    %799 = vmatmul.f32.gmra.mxu0 %v724
    %v800 = vpop.f32.mrf.mxu0
    %v801 = vadd.f32 %v777, %v800
    %802 = vdwg.mxu0
    %803 = vmatpush.msra.mxu0 %v772
    %804 = vmatpush.msra.mxu0 %v769
    %805 = vmatpush.msra.mxu0 %v766
    %806 = vmatpush.msra.mxu0 %v763
    %807 = vmatpush.msra.mxu0 %v760
    %808 = vmatpush.msra.mxu0 %v757
    %809 = vmatpush.msra.mxu0 %v754
    %810 = vmatpush.msra.mxu0 %v751
    %811 = vmatpush.msra.mxu0 %v748
    %812 = vmatpush.msra.mxu0 %v745
    %813 = vmatpush.msra.mxu0 %v742
    %814 = vmatpush.msra.mxu0 %v739
    %815 = vmatpush.msra.mxu0 %v736
    %816 = vmatpush.msra.mxu0 %v733
    %817 = vmatpush.msra.mxu0 %v730
    %818 = vmatpush.msra.mxu0 %v727
    %819 = vmatmul.f32.gmra.mxu0 %v724
    %v820 = vpop.f32.mrf.mxu0
    %v821 = vadd.f32 %v778, %v820
    %822 = vdwg.mxu0
    %823 = vmatpush.msra.mxu0 %v773
    %824 = vmatpush.msra.mxu0 %v770
    %825 = vmatpush.msra.mxu0 %v767
    %826 = vmatpush.msra.mxu0 %v764
    %827 = vmatpush.msra.mxu0 %v761
    %828 = vmatpush.msra.mxu0 %v758
    %829 = vmatpush.msra.mxu0 %v755
    %830 = vmatpush.msra.mxu0 %v752
    %831 = vmatpush.msra.mxu0 %v749
    %832 = vmatpush.msra.mxu0 %v746
    %833 = vmatpush.msra.mxu0 %v743
    %834 = vmatpush.msra.mxu0 %v740
    %835 = vmatpush.msra.mxu0 %v737
    %836 = vmatpush.msra.mxu0 %v734
    %837 = vmatpush.msra.mxu0 %v731
    %838 = vmatpush.msra.mxu0 %v728
    %839 = vmatmul.f32.gmra.mxu0 %v724
    %v840 = vpop.f32.mrf.mxu0
    %v841 = vadd.f32 %v779, %v840
    %842 = vdwg.mxu0
    %v844 = vsel %vm258, %v801, 0
    %v847 = vsel %vm258, %v821, 0
    %849 = vmatpush.xpose.msra.mxu0 0.0
    %850 = vmatpush.xpose.msra.mxu0 0.0
    %851 = vmatpush.xpose.msra.mxu0 0.0
    %852 = vmatpush.xpose.msra.mxu0 0.0
    %853 = vmatpush.xpose.msra.mxu0 0.0
    %854 = vmatpush.xpose.msra.mxu0 0.0
    %855 = vmatpush.xpose.msra.mxu0 0.0
    %856 = vmatpush.xpose.msra.mxu0 0.0
    %857 = vmatpush.xpose.msra.mxu0 0.0
    %858 = vmatpush.xpose.msra.mxu0 0.0
    %859 = vmatpush.xpose.msra.mxu0 0.0
    %860 = vmatpush.xpose.msra.mxu0 0.0
    %861 = vmatpush.xpose.msra.mxu0 0.0
    %862 = vmatpush.xpose.msra.mxu0 0.0
    %863 = vmatpush.xpose.msra.mxu0 0.0
    %864 = vmatpush.xpose.msra.mxu0 %v847
    %865 = vmatmul.f32.gmra.mxu0 %v844
    %v866 = vpop.f32.mrf.mxu0
    %v867 = vadd.f32 0.0, %v866
    %868 = vdwg.mxu0
    %v869 = vmul.f32 %v867, 0.35355338
    %v870 = vadd.f32 %v869, %v140
    %v871 = vsel %vm258, %v870, -inf
    %872 = vmax.xlane.f32.xlu0 %v871
    %v873 = vpop.xlane.xlu0 %872
    %v874 = vsub.f32 %v870, %v873
    %v875 = vmul.f32 %v874, 1.442695
    %v876 = vpow.pop %v875
    %v877 = vsel %vm258, %v876, 0.0
    %878 = vadd.xlane.f32.xlu0 %v877
    %v879 = vpop.xlane.xlu0 %878
    %v880 = vrcp.pop %v879
    %v881 = vmul.f32 %v876, %v880
    %v883 = vsel %vm258, %v881, 0
    %885 = vmatpush.msra.mxu0 0.0
    %886 = vmatpush.msra.mxu0 0.0
    %887 = vmatpush.msra.mxu0 0.0
    %888 = vmatpush.msra.mxu0 0.0
    %889 = vmatpush.msra.mxu0 0.0
    %890 = vmatpush.msra.mxu0 0.0
    %891 = vmatpush.msra.mxu0 0.0
    %892 = vmatpush.msra.mxu0 0.0
    %893 = vmatpush.msra.mxu0 0.0
    %894 = vmatpush.msra.mxu0 0.0
    %895 = vmatpush.msra.mxu0 0.0
    %896 = vmatpush.msra.mxu0 0.0
    %897 = vmatpush.msra.mxu0 0.0
    %898 = vmatpush.msra.mxu0 0.0
    %899 = vmatpush.msra.mxu0 0.0
    %900 = vmatpush.msra.mxu0 %v841
    %901 = vmatmul.f32.gmra.mxu0 %v883
    %v902 = vpop.f32.mrf.mxu0
    %v903 = vadd.f32 0.0, %v902
    %904 = vdwg.mxu0
    %905 = vrot.lane.b32.xlu0 %v801, 120
    %v906 = vpop.permute.xlu0 %905
    %907 = vrot.lane.b32.xlu0 %v821, 120
    %v908 = vpop.permute.xlu0 %907
    %v909 = vsel %vm258, %v906, 0
    %v911 = vsel %vm258, %v908, 0
    %913 = vmatpush.xpose.msra.mxu0 0.0
    %914 = vmatpush.xpose.msra.mxu0 0.0
    %915 = vmatpush.xpose.msra.mxu0 0.0
    %916 = vmatpush.xpose.msra.mxu0 0.0
    %917 = vmatpush.xpose.msra.mxu0 0.0
    %918 = vmatpush.xpose.msra.mxu0 0.0
    %919 = vmatpush.xpose.msra.mxu0 0.0
    %920 = vmatpush.xpose.msra.mxu0 0.0
    %921 = vmatpush.xpose.msra.mxu0 0.0
    %922 = vmatpush.xpose.msra.mxu0 0.0
    %923 = vmatpush.xpose.msra.mxu0 0.0
    %924 = vmatpush.xpose.msra.mxu0 0.0
    %925 = vmatpush.xpose.msra.mxu0 0.0
    %926 = vmatpush.xpose.msra.mxu0 0.0
    %927 = vmatpush.xpose.msra.mxu0 0.0
    %928 = vmatpush.xpose.msra.mxu0 %v911
    %929 = vmatmul.f32.gmra.mxu0 %v909
    %v930 = vpop.f32.mrf.mxu0
    %v931 = vadd.f32 0.0, %v930
    %932 = vdwg.mxu0
    %v933 = vmul.f32 %v931, 0.35355338
    %v934 = vadd.f32 %v933, %v140
    %v935 = vsel %vm258, %v934, -inf
    %936 = vmax.xlane.f32.xlu0 %v935
    %v937 = vpop.xlane.xlu0 %936
    %v938 = vsub.f32 %v934, %v937
    %v939 = vmul.f32 %v938, 1.442695
    %v940 = vpow.pop %v939
    %v941 = vsel %vm258, %v940, 0.0
    %942 = vadd.xlane.f32.xlu0 %v941
    %v943 = vpop.xlane.xlu0 %942
    %v944 = vrcp.pop %v943
    %v945 = vmul.f32 %v940, %v944
    %947 = vrot.lane.b32.xlu0 %v841, 120
    %v948 = vpop.permute.xlu0 %947
    %v951 = vsel %vm258, %v945, 0
    %953 = vmatpush.msra.mxu0 0.0
    %954 = vmatpush.msra.mxu0 0.0
    %955 = vmatpush.msra.mxu0 0.0
    %956 = vmatpush.msra.mxu0 0.0
    %957 = vmatpush.msra.mxu0 0.0
    %958 = vmatpush.msra.mxu0 0.0
    %959 = vmatpush.msra.mxu0 0.0
    %960 = vmatpush.msra.mxu0 0.0
    %961 = vmatpush.msra.mxu0 0.0
    %962 = vmatpush.msra.mxu0 0.0
    %963 = vmatpush.msra.mxu0 0.0
    %964 = vmatpush.msra.mxu0 0.0
    %965 = vmatpush.msra.mxu0 0.0
    %966 = vmatpush.msra.mxu0 0.0
    %967 = vmatpush.msra.mxu0 0.0
    %968 = vmatpush.msra.mxu0 %v948
    %969 = vmatmul.f32.gmra.mxu0 %v951
    %v970 = vpop.f32.mrf.mxu0
    %v971 = vadd.f32 0.0, %v970
    %972 = vdwg.mxu0
    %973 = vrot.lane.b32.xlu0 %v801, 112
    %v974 = vpop.permute.xlu0 %973
    %975 = vrot.lane.b32.xlu0 %v821, 112
    %v976 = vpop.permute.xlu0 %975
    %v977 = vsel %vm258, %v974, 0
    %v979 = vsel %vm258, %v976, 0
    %981 = vmatpush.xpose.msra.mxu0 0.0
    %982 = vmatpush.xpose.msra.mxu0 0.0
    %983 = vmatpush.xpose.msra.mxu0 0.0
    %984 = vmatpush.xpose.msra.mxu0 0.0
    %985 = vmatpush.xpose.msra.mxu0 0.0
    %986 = vmatpush.xpose.msra.mxu0 0.0
    %987 = vmatpush.xpose.msra.mxu0 0.0
    %988 = vmatpush.xpose.msra.mxu0 0.0
    %989 = vmatpush.xpose.msra.mxu0 0.0
    %990 = vmatpush.xpose.msra.mxu0 0.0
    %991 = vmatpush.xpose.msra.mxu0 0.0
    %992 = vmatpush.xpose.msra.mxu0 0.0
    %993 = vmatpush.xpose.msra.mxu0 0.0
    %994 = vmatpush.xpose.msra.mxu0 0.0
    %995 = vmatpush.xpose.msra.mxu0 0.0
    %996 = vmatpush.xpose.msra.mxu0 %v979
    %997 = vmatmul.f32.gmra.mxu0 %v977
    %v998 = vpop.f32.mrf.mxu0
    %v999 = vadd.f32 0.0, %v998
    %1000 = vdwg.mxu0
    %v1001 = vmul.f32 %v999, 0.35355338
    %v1002 = vadd.f32 %v1001, %v140
    %v1003 = vsel %vm258, %v1002, -inf
    %1004 = vmax.xlane.f32.xlu0 %v1003
    %v1005 = vpop.xlane.xlu0 %1004
    %v1006 = vsub.f32 %v1002, %v1005
    %v1007 = vmul.f32 %v1006, 1.442695
    %v1008 = vpow.pop %v1007
    %v1009 = vsel %vm258, %v1008, 0.0
    %1010 = vadd.xlane.f32.xlu0 %v1009
    %v1011 = vpop.xlane.xlu0 %1010
    %v1012 = vrcp.pop %v1011
    %v1013 = vmul.f32 %v1008, %v1012
    %1014 = vrot.lane.b32.xlu0 %v841, 112
    %v1015 = vpop.permute.xlu0 %1014
    %v1018 = vsel %vm258, %v1013, 0
    %1020 = vmatpush.msra.mxu0 0.0
    %1021 = vmatpush.msra.mxu0 0.0
    %1022 = vmatpush.msra.mxu0 0.0
    %1023 = vmatpush.msra.mxu0 0.0
    %1024 = vmatpush.msra.mxu0 0.0
    %1025 = vmatpush.msra.mxu0 0.0
    %1026 = vmatpush.msra.mxu0 0.0
    %1027 = vmatpush.msra.mxu0 0.0
    %1028 = vmatpush.msra.mxu0 0.0
    %1029 = vmatpush.msra.mxu0 0.0
    %1030 = vmatpush.msra.mxu0 0.0
    %1031 = vmatpush.msra.mxu0 0.0
    %1032 = vmatpush.msra.mxu0 0.0
    %1033 = vmatpush.msra.mxu0 0.0
    %1034 = vmatpush.msra.mxu0 0.0
    %1035 = vmatpush.msra.mxu0 %v1015
    %1036 = vmatmul.f32.gmra.mxu0 %v1018
    %v1037 = vpop.f32.mrf.mxu0
    %v1038 = vadd.f32 0.0, %v1037
    %1039 = vdwg.mxu0
    %1040 = vrot.lane.b32.xlu0 %v801, 104
    %v1041 = vpop.permute.xlu0 %1040
    %1042 = vrot.lane.b32.xlu0 %v821, 104
    %v1043 = vpop.permute.xlu0 %1042
    %v1044 = vsel %vm258, %v1041, 0
    %v1046 = vsel %vm258, %v1043, 0
    %1048 = vmatpush.xpose.msra.mxu0 0.0
    %1049 = vmatpush.xpose.msra.mxu0 0.0
    %1050 = vmatpush.xpose.msra.mxu0 0.0
    %1051 = vmatpush.xpose.msra.mxu0 0.0
    %1052 = vmatpush.xpose.msra.mxu0 0.0
    %1053 = vmatpush.xpose.msra.mxu0 0.0
    %1054 = vmatpush.xpose.msra.mxu0 0.0
    %1055 = vmatpush.xpose.msra.mxu0 0.0
    %1056 = vmatpush.xpose.msra.mxu0 0.0
    %1057 = vmatpush.xpose.msra.mxu0 0.0
    %1058 = vmatpush.xpose.msra.mxu0 0.0
    %1059 = vmatpush.xpose.msra.mxu0 0.0
    %1060 = vmatpush.xpose.msra.mxu0 0.0
    %1061 = vmatpush.xpose.msra.mxu0 0.0
    %1062 = vmatpush.xpose.msra.mxu0 0.0
    %1063 = vmatpush.xpose.msra.mxu0 %v1046
    %1064 = vmatmul.f32.gmra.mxu0 %v1044
    %v1065 = vpop.f32.mrf.mxu0
    %v1066 = vadd.f32 0.0, %v1065
    %1067 = vdwg.mxu0
    %v1068 = vmul.f32 %v1066, 0.35355338
    %v1069 = vadd.f32 %v1068, %v140
    %v1070 = vsel %vm258, %v1069, -inf
    %1071 = vmax.xlane.f32.xlu0 %v1070
    %v1072 = vpop.xlane.xlu0 %1071
    %v1073 = vsub.f32 %v1069, %v1072
    %v1074 = vmul.f32 %v1073, 1.442695
    %v1075 = vpow.pop %v1074
    %v1076 = vsel %vm258, %v1075, 0.0
    %1077 = vadd.xlane.f32.xlu0 %v1076
    %v1078 = vpop.xlane.xlu0 %1077
    %v1079 = vrcp.pop %v1078
    %v1080 = vmul.f32 %v1075, %v1079
    %1081 = vrot.lane.b32.xlu0 %v841, 104
    %v1082 = vpop.permute.xlu0 %1081
    %v1085 = vsel %vm258, %v1080, 0
    %1087 = vmatpush.msra.mxu0 0.0
    %1088 = vmatpush.msra.mxu0 0.0
    %1089 = vmatpush.msra.mxu0 0.0
    %1090 = vmatpush.msra.mxu0 0.0
    %1091 = vmatpush.msra.mxu0 0.0
    %1092 = vmatpush.msra.mxu0 0.0
    %1093 = vmatpush.msra.mxu0 0.0
    %1094 = vmatpush.msra.mxu0 0.0
    %1095 = vmatpush.msra.mxu0 0.0
    %1096 = vmatpush.msra.mxu0 0.0
    %1097 = vmatpush.msra.mxu0 0.0
    %1098 = vmatpush.msra.mxu0 0.0
    %1099 = vmatpush.msra.mxu0 0.0
    %1100 = vmatpush.msra.mxu0 0.0
    %1101 = vmatpush.msra.mxu0 0.0
    %1102 = vmatpush.msra.mxu0 %v1082
    %1103 = vmatmul.f32.gmra.mxu0 %v1085
    %v1104 = vpop.f32.mrf.mxu0
    %v1105 = vadd.f32 0.0, %v1104
    %1106 = vdwg.mxu0
    %1108 = vrot.lane.b32.xlu0 %v971, 8
    %v1109 = vpop.permute.xlu0 %1108
    %1112 = vrot.lane.b32.xlu0 %v1038, 16
    %v1113 = vpop.permute.xlu0 %1112
    %1116 = vrot.lane.b32.xlu0 %v1105, 24
    %v1117 = vpop.permute.xlu0 %1116
    %v1119 = vsel %vm258, %v903, %v1109
    %v1120 = vsel %vm536, %v1119, %v1113
    %v1121 = vsel %vm538, %v1120, %v1117
    %s1122 = scalar_lea.vmem %s6, 32
    %v1123 = vld [vmem:[%s1122] sm:$0xff]
    %v1124 = vld [vmem:[%s1122 + $0x8] sm:$0xff]
    %v1125 = vld [vmem:[%s1122 + $0x10] sm:$0xff]
    %v1126 = vld [vmem:[%s1122 + $0x18] sm:$0xff]
    %s1127 = scalar_lea.vmem %s7, 1
    %v1128 = vld [vmem:[%s1127] sm:$0x1]
    %v1130 = vperm.slane %v1128, 0
    %v1133 = vsel %vm548, %v1121, 0
    %1135 = vmatpush.msra.mxu0 0.0
    %1136 = vmatpush.msra.mxu0 0.0
    %1137 = vmatpush.msra.mxu0 0.0
    %1138 = vmatpush.msra.mxu0 0.0
    %1139 = vmatpush.msra.mxu0 0.0
    %1140 = vmatpush.msra.mxu0 0.0
    %1141 = vmatpush.msra.mxu0 0.0
    %1142 = vmatpush.msra.mxu0 0.0
    %1143 = vmatpush.msra.mxu0 0.0
    %1144 = vmatpush.msra.mxu0 0.0
    %1145 = vmatpush.msra.mxu0 0.0
    %1146 = vmatpush.msra.mxu0 0.0
    %1147 = vmatpush.msra.mxu0 %v1126
    %1148 = vmatpush.msra.mxu0 %v1125
    %1149 = vmatpush.msra.mxu0 %v1124
    %1150 = vmatpush.msra.mxu0 %v1123
    %1151 = vmatmul.f32.gmra.mxu0 %v1133
    %v1152 = vpop.f32.mrf.mxu0
    %v1153 = vadd.f32 %v1130, %v1152
    %1154 = vdwg.mxu0
    %v1155 = vadd.f32 %v724, %v1153
    %s1156 = scalar_lea.vmem %s8, 1
    %v1157 = vld [vmem:[%s1156] sm:$0x1]
    %s1158 = scalar_lea.vmem %s9, 1
    %v1159 = vld [vmem:[%s1158] sm:$0x1]
    %1160 = vadd.xlane.f32.xlu0 %v1155
    %v1161 = vpop.xlane.xlu0 %1160
    %v1162 = vmul.f32 %v1161, 0.03125
    %v1163 = vsub.f32 %v1155, %v1162
    %v1164 = vmul.f32 %v1163, %v105
    %v1165 = vmul.f32 %v1164, %v1164
    %1166 = vadd.xlane.f32.xlu0 %v1165
    %v1167 = vpop.xlane.xlu0 %1166
    %v1168 = vmul.f32 %v1167, 0.03125
    %v1169 = vadd.f32 %v1168, 1e-12
    %v1170 = vrsqrt.pop %v1169
    %v1171 = vmul.f32 %v1170, %v1169
    %v1172 = vmul.f32 %v1171, %v1170
    %v1173 = vmul.f32 0.5, %v1172
    %v1174 = vsub.f32 1.5, %v1173
    %v1175 = vmul.f32 %v1170, %v1174
    %vm1176 = vweird.f32 %v1169
    %vm1177 = vweird.f32 %v1170
    %vm1178 = vmor %vm1176, %vm1177
    %v1179 = vsel %vm1178, %v1170, %v1175
    %v1180 = vmul.f32 %v1164, %v1179
    %v1182 = vperm.slane %v1157, 0
    %v1184 = vmul.f32 %v1180, %v1182
    %v1186 = vperm.slane %v1159, 0
    %v1188 = vadd.f32 %v1184, %v1186
    %s1189 = scalar_lea.vmem [#allocation5], 128
    %v1190 = vld [vmem:[%s1189] sm:$0xff]
    %v1191 = vld [vmem:[%s1189 + $0x8] sm:$0xff]
    %v1192 = vld [vmem:[%s1189 + $0x10] sm:$0xff]
    %v1193 = vld [vmem:[%s1189 + $0x18] sm:$0xff]
    %v1194 = vld [vmem:[%s1189 + $0x20] sm:$0xff]
    %v1195 = vld [vmem:[%s1189 + $0x28] sm:$0xff]
    %v1196 = vld [vmem:[%s1189 + $0x30] sm:$0xff]
    %v1197 = vld [vmem:[%s1189 + $0x38] sm:$0xff]
    %v1198 = vld [vmem:[%s1189 + $0x40] sm:$0xff]
    %v1199 = vld [vmem:[%s1189 + $0x48] sm:$0xff]
    %v1200 = vld [vmem:[%s1189 + $0x50] sm:$0xff]
    %v1201 = vld [vmem:[%s1189 + $0x58] sm:$0xff]
    %v1202 = vld [vmem:[%s1189 + $0x60] sm:$0xff]
    %v1203 = vld [vmem:[%s1189 + $0x68] sm:$0xff]
    %v1204 = vld [vmem:[%s1189 + $0x70] sm:$0xff]
    %v1205 = vld [vmem:[%s1189 + $0x78] sm:$0xff]
    %s1206 = scalar_lea.vmem %s11, 1
    %v1207 = vld [vmem:[%s1206] sm:$0x1]
    %v1209 = vperm.slane %v1207, 0
    %1211 = vmatpush.msra.mxu0 %v1205
    %1212 = vmatpush.msra.mxu0 %v1204
    %1213 = vmatpush.msra.mxu0 %v1203
    %1214 = vmatpush.msra.mxu0 %v1202
    %1215 = vmatpush.msra.mxu0 %v1201
    %1216 = vmatpush.msra.mxu0 %v1200
    %1217 = vmatpush.msra.mxu0 %v1199
    %1218 = vmatpush.msra.mxu0 %v1198
    %1219 = vmatpush.msra.mxu0 %v1197
    %1220 = vmatpush.msra.mxu0 %v1196
    %1221 = vmatpush.msra.mxu0 %v1195
    %1222 = vmatpush.msra.mxu0 %v1194
    %1223 = vmatpush.msra.mxu0 %v1193
    %1224 = vmatpush.msra.mxu0 %v1192
    %1225 = vmatpush.msra.mxu0 %v1191
    %1226 = vmatpush.msra.mxu0 %v1190
    %1227 = vmatmul.f32.gmra.mxu0 %v1188
    %v1228 = vpop.f32.mrf.mxu0
    %v1229 = vadd.f32 %v1209, %v1228
    %1230 = vdwg.mxu0
    %v1231 = vmul.f32 %v1229, 0.5
    %v1232 = vmul.f32 %v1229, 0.044715
    %v1233 = vmul.f32 %v1232, %v1229
    %v1234 = vmul.f32 %v1233, %v1229
    %v1235 = vadd.f32 %v1229, %v1234
    %v1236 = vmul.f32 %v1235, 0.7978846
    %v1237 = vtanh.pop %v1236
    %v1238 = vadd.f32 %v1237, 1.0
    %v1239 = vmul.f32 %v1231, %v1238
    %s1240 = scalar_lea.vmem [#allocation7], 128
    %v1241 = vld [vmem:[%s1240] sm:$0xff]
    %v1242 = vld [vmem:[%s1240 + $0x8] sm:$0xff]
    %v1243 = vld [vmem:[%s1240 + $0x10] sm:$0xff]
    %v1244 = vld [vmem:[%s1240 + $0x18] sm:$0xff]
    %v1245 = vld [vmem:[%s1240 + $0x20] sm:$0xff]
    %v1246 = vld [vmem:[%s1240 + $0x28] sm:$0xff]
    %v1247 = vld [vmem:[%s1240 + $0x30] sm:$0xff]
    %v1248 = vld [vmem:[%s1240 + $0x38] sm:$0xff]
    %v1249 = vld [vmem:[%s1240 + $0x40] sm:$0xff]
    %v1250 = vld [vmem:[%s1240 + $0x48] sm:$0xff]
    %v1251 = vld [vmem:[%s1240 + $0x50] sm:$0xff]
    %v1252 = vld [vmem:[%s1240 + $0x58] sm:$0xff]
    %v1253 = vld [vmem:[%s1240 + $0x60] sm:$0xff]
    %v1254 = vld [vmem:[%s1240 + $0x68] sm:$0xff]
    %v1255 = vld [vmem:[%s1240 + $0x70] sm:$0xff]
    %v1256 = vld [vmem:[%s1240 + $0x78] sm:$0xff]
    %s1257 = scalar_lea.vmem %s13, 1
    %v1258 = vld [vmem:[%s1257] sm:$0x1]
    %v1260 = vperm.slane %v1258, 0
    %1262 = vmatpush.msra.mxu0 %v1256
    %1263 = vmatpush.msra.mxu0 %v1255
    %1264 = vmatpush.msra.mxu0 %v1254
    %1265 = vmatpush.msra.mxu0 %v1253
    %1266 = vmatpush.msra.mxu0 %v1252
    %1267 = vmatpush.msra.mxu0 %v1251
    %1268 = vmatpush.msra.mxu0 %v1250
    %1269 = vmatpush.msra.mxu0 %v1249
    %1270 = vmatpush.msra.mxu0 %v1248
    %1271 = vmatpush.msra.mxu0 %v1247
    %1272 = vmatpush.msra.mxu0 %v1246
    %1273 = vmatpush.msra.mxu0 %v1245
    %1274 = vmatpush.msra.mxu0 %v1244
    %1275 = vmatpush.msra.mxu0 %v1243
    %1276 = vmatpush.msra.mxu0 %v1242
    %1277 = vmatpush.msra.mxu0 %v1241
    %1278 = vmatmul.f32.gmra.mxu0 %v1239
    %v1279 = vpop.f32.mrf.mxu0
    %v1280 = vadd.f32 %v1260, %v1279
    %1281 = vdwg.mxu0
    %v1282 = vadd.f32 %v1188, %v1280
    %s1283 = scalar_lea.vmem %s14, 1
    %v1284 = vld [vmem:[%s1283] sm:$0x1]
    %s1285 = scalar_lea.vmem %s15, 1
    %v1286 = vld [vmem:[%s1285] sm:$0x1]
    %1287 = vadd.xlane.f32.xlu0 %v1282
    %v1288 = vpop.xlane.xlu0 %1287
    %v1289 = vmul.f32 %v1288, 0.03125
    %v1290 = vsub.f32 %v1282, %v1289
    %v1291 = vmul.f32 %v1290, %v105
    %v1292 = vmul.f32 %v1291, %v1291
    %1293 = vadd.xlane.f32.xlu0 %v1292
    %v1294 = vpop.xlane.xlu0 %1293
    %v1295 = vmul.f32 %v1294, 0.03125
    %v1296 = vadd.f32 %v1295, 1e-12
    %v1297 = vrsqrt.pop %v1296
    %v1298 = vmul.f32 %v1297, %v1296
    %v1299 = vmul.f32 %v1298, %v1297
    %v1300 = vmul.f32 0.5, %v1299
    %v1301 = vsub.f32 1.5, %v1300
    %v1302 = vmul.f32 %v1297, %v1301
    %vm1303 = vweird.f32 %v1296
    %vm1304 = vweird.f32 %v1297
    %vm1305 = vmor %vm1303, %vm1304
    %v1306 = vsel %vm1305, %v1297, %v1302
    %v1307 = vmul.f32 %v1291, %v1306
    %v1309 = vperm.slane %v1284, 0
    %v1311 = vmul.f32 %v1307, %v1309
    %v1313 = vperm.slane %v1286, 0
    %v1315 = vadd.f32 %v1311, %v1313
    %v1316 = vmul.f32 %v1315, %v1315
    %vm1317 = vcmask 1040384
    %v1318 = vsel %vm1317, %v1316, 0.0
    %1319 = vadd.xlane.f32.xlu0 %v1318
    %v1320 = vpop.xlane.xlu0 %1319
    %v1321 = vmax.f32 %v1320, 1e-24
    %v1322 = vrsqrt.pop %v1321
    %v1323 = vmul.f32 %v1322, %v1321
    %v1324 = vmul.f32 %v1323, %v1322
    %v1325 = vmul.f32 0.5, %v1324
    %v1326 = vsub.f32 1.5, %v1325
    %v1327 = vmul.f32 %v1322, %v1326
    %vm1328 = vweird.f32 %v1321
    %vm1329 = vweird.f32 %v1322
    %vm1330 = vmor %vm1328, %vm1329
    %v1331 = vsel %vm1330, %v1322, %v1327
    %v1332 = vmul.f32 %v1315, %v1331
    %1333 = vst [vmem:[#allocation8] sm:$0x1] %v1332
    // Predicated region
    $region78: #{bge_forward.1} parent=1 // pred_check
      _
    $region79: #{bge_forward.1} parent=1 // pred_check_branch
      %1335 = sbr.rel (0) target = $region81
    $region80: #{bge_forward.1} parent=1 // pred_region
      %1337 = vsyncadd [#allocation4], 0
      %s1339 = sshll.u32 [#allocation8], 4
      %s1340 = int_to_ptr.vmem [resolvable:$true] %s1339
      %s1341 = sshll.u32 %s16, 4
      %s1342 = int_to_ptr.hbm [resolvable:$true] %s1341
      %1344 = dma.vmem_to_hbm [thread:$0]  %s1340, 16, %s1342, [#allocation4]
    $region81: #{bge_forward.1} parent=1 // pred_fallthru
      _
    // Predicated region
    $region82: #{bge_forward.1} parent=1 // pred_check
      _
    $region83: #{bge_forward.1} parent=1 // pred_check_branch
      %1346 = sbr.rel (0) target = $region85
    $region84: #{bge_forward.1} parent=1 // pred_region
      %1348 = dma.done [#allocation4], 16
    $region85: #{bge_forward.1} parent=1 // pred_fallthru
      _
    %1349 = vsyncpa [#allocation3], 1
    %1350 = vsyncpa [#allocation6], 1
    %1351 = vsyncpa [#allocation4], 1

</llo_original>
